<compile_context>
chip_gen: v7x
topology: tpu7x:2x2x1
jax: 0.10.0
libtpu: 0.0.40
codegen_flags: <defaults>
</compile_context>

<pallas_src>
import math
from functools import partial

import jax
import jax.numpy as jnp
from jax import lax
from jax.experimental import pallas as pl
from jax.experimental.pallas import tpu as pltpu

F32 = jnp.float32
BF16 = jnp.bfloat16
_VMEM_LIMIT = 48 * 1024 * 1024   # <= ~48 MiB: safe on v7x, lifts v5e/v6e default


def _pick_graph_tile(num_graphs, per_graph_bytes, cap=None):
    """Largest #graphs per grid step that divides G and fits a VMEM budget."""
    budget = _VMEM_LIMIT // 6          # double buffering + several operands
    gb = max(1, min(num_graphs, budget // max(int(per_graph_bytes), 1)))
    if cap is not None:
        gb = max(1, min(gb, int(cap)))
    while num_graphs % gb:
        gb -= 1
    return gb


def _dinv(deg):
    """deg^-1/2 with deg == 0 -> 0 (GCN normalization of isolated nodes)."""
    return jnp.where(deg > 0.0, lax.rsqrt(jnp.maximum(deg, 1e-12)), 0.0)


def _mosaic_params():
    return pltpu.CompilerParams(dimension_semantics=("parallel",),
                                vmem_limit_bytes=_VMEM_LIMIT)


# --------------------------------------------------------------------------
# Kernel 1: fused GCNConv(+relu) + NodeInformationScore on the raw adjacency.
#   grid = (G // gb,), per-graph blocks.
# --------------------------------------------------------------------------
def _conv1_info_kernel(a_ref, xw_ref, b_ref, h_ref, s_ref):
    # a_ref : [gb, n, n] bf16 ; xw_ref : [gb, n, H] f32 (X @ W hoisted)
    a = a_ref[...]
    a32 = a.astype(F32)
    n = a.shape[-1]

    # degrees + self-loop fill, computed from the VMEM-resident block
    eye = (lax.broadcasted_iota(jnp.int32, (1, n, n), 1)
           == lax.broadcasted_iota(jnp.int32, (1, n, n), 2))
    rowsum = jnp.sum(a32, axis=-1, keepdims=True)                      # [gb,n,1]
    diag = jnp.sum(jnp.where(eye, a32, 0.0), axis=-1, keepdims=True)   # [gb,n,1]
    loop_add = jnp.where(diag == 0.0, 1.0, 0.0)
    dinv_l = _dinv(rowsum + loop_add)   # with self loops (GCNConv)
    dinv_n = _dinv(rowsum)              # without (NodeInformationScore)

    # GCN: D^-1/2 (A + diag(add)) D^-1/2 (XW) + b, relu.  Column scale folded
    # onto the small XW operand; raw A block goes straight to the MXU (bf16).
    xw = xw_ref[...]
    agg = jnp.einsum('gij,gjh->gih', a, (xw * dinv_l).astype(BF16),
                     preferred_element_type=jnp.float32)
    z = dinv_l * agg + (loop_add * dinv_l * dinv_l) * xw + b_ref[...]
    h = jnp.maximum(z, 0.0)
    h_ref[...] = h

    # info score: s_i = sum_f | H_i - (Dn^-1/2 A Dn^-1/2 H)_i |
    agg2 = jnp.einsum('gij,gjh->gih', a, (h * dinv_n).astype(BF16),
                      preferred_element_type=jnp.float32)
    s_ref[...] = jnp.sum(jnp.abs(h - dinv_n * agg2), axis=-1, keepdims=True)


def conv1_info(a_bf, xw, b, graph_tile=None):
    g, n, _ = a_bf.shape
    hd = xw.shape[-1]
    per_graph = 2 * n * n + 12 * n * hd + 8 * n
    gb = _pick_graph_tile(g, per_graph, cap=graph_tile)
    return pl.pallas_call(
        _conv1_info_kernel,
        out_shape=(jax.ShapeDtypeStruct((g, n, hd), F32),
                   jax.ShapeDtypeStruct((g, n, 1), F32)),
        grid=(g // gb,),
        in_specs=[
            pl.BlockSpec((gb, n, n), lambda i: (i, 0, 0)),    # A (bf16 stream)
            pl.BlockSpec((gb, n, hd), lambda i: (i, 0, 0)),   # X @ W (hoisted)
            pl.BlockSpec((1, 1, hd), lambda i: (0, 0, 0)),    # bias
        ],
        out_specs=(pl.BlockSpec((gb, n, hd), lambda i: (i, 0, 0)),
                   pl.BlockSpec((gb, n, 1), lambda i: (i, 0, 0))),
        compiler_params=_mosaic_params(),
    )(a_bf, xw, b)


# --------------------------------------------------------------------------
# Kernel 2: fused HGP-SL structure learning + conv2(+relu) + info score +
#           readout of the pooled features.  One graph block per grid step;
#           no cross-graph mask needed (blocks are per graph by construction).
# --------------------------------------------------------------------------
def make_sl_conv_info_kernel(lamb, neg_slope, inv_k, hid):
    def kernel(aind_ref, sl_ref, sr_ref, xp_ref, xw_ref, b_ref,
               anew_ref, h_ref, s_ref, r_ref):
        # ---- structure learning: dense per-graph scores + row softmax ----
        # TODO(synk): sparse_attention=True (sparsemax) approximated by softmax.
        w = sl_ref[...] + sr_ref[...]                      # [gb, k, k]
        w = jnp.where(w > 0, w, neg_slope * w)             # leaky relu
        w = w + lamb * aind_ref[...].astype(F32)
        w = w - jnp.max(w, axis=-1, keepdims=True)
        e = jnp.exp(w)
        a_new = e * pl.reciprocal(jnp.sum(e, axis=-1, keepdims=True), approx=True)
        a_bf = a_new.astype(BF16)
        anew_ref[...] = a_bf                               # bf16 stream to HBM

        # ---- conv2 + relu.  Softmax rows have a positive diagonal, so
        # add_remaining_self_loops is a no-op here and deg == rowsum. ----
        rowsum = jnp.sum(a_new, axis=-1, keepdims=True)    # [gb, k, 1]
        dinv = _dinv(rowsum)
        xw = xw_ref[...]
        agg = jnp.einsum('gij,gjh->gih', a_bf, (xw * dinv).astype(BF16),
                         preferred_element_type=jnp.float32)
        h = jnp.maximum(dinv * agg + b_ref[...], 0.0)
        h_ref[...] = h

        # ---- info score on the learned adjacency (for the next top-k) ----
        agg2 = jnp.einsum('gij,gjh->gih', a_bf, (h * dinv).astype(BF16),
                          preferred_element_type=jnp.float32)
        s_ref[...] = jnp.sum(jnp.abs(h - dinv * agg2), axis=-1, keepdims=True)

        # ---- readout of the pooled features: relu([gmp || gap](x_pool)) ----
        xp = xp_ref[...]                                    # [gb, k, H]
        r_ref[:, :, :hid] = jnp.maximum(jnp.max(xp, axis=1, keepdims=True), 0.0)
        r_ref[:, :, hid:] = jnp.maximum(
            jnp.sum(xp, axis=1, keepdims=True) * inv_k, 0.0)
    return kernel


def sl_conv_info(a_ind, sl_col, sr_row, x_p, xw, b, lamb, graph_tile=None,
                 neg_slope=0.2):
    g, k, _ = a_ind.shape
    hd = xw.shape[-1]
    per_graph = 4 * k * k + 16 * k * hd + 16 * k + 8 * hd
    gb = _pick_graph_tile(g, per_graph, cap=graph_tile)
    kern = make_sl_conv_info_kernel(float(lamb), float(neg_slope),
                                    1.0 / float(k), hd)
    return pl.pallas_call(
        kern,
        out_shape=(jax.ShapeDtypeStruct((g, k, k), BF16),      # learned A
                   jax.ShapeDtypeStruct((g, k, hd), F32),      # relu(conv2)
                   jax.ShapeDtypeStruct((g, k, 1), F32),       # info score
                   jax.ShapeDtypeStruct((g, 1, 2 * hd), F32)), # readout(x_p1)
        grid=(g // gb,),
        in_specs=[
            pl.BlockSpec((gb, k, k), lambda i: (i, 0, 0)),     # induced A (bf16)
            pl.BlockSpec((gb, k, 1), lambda i: (i, 0, 0)),     # x . att_l
            pl.BlockSpec((gb, 1, k), lambda i: (i, 0, 0)),     # x . att_r
            pl.BlockSpec((gb, k, hd), lambda i: (i, 0, 0)),    # x_pool (readout)
            pl.BlockSpec((gb, k, hd), lambda i: (i, 0, 0)),    # x_pool @ W2
            pl.BlockSpec((1, 1, hd), lambda i: (0, 0, 0)),     # bias
        ],
        out_specs=(pl.BlockSpec((gb, k, k), lambda i: (i, 0, 0)),
                   pl.BlockSpec((gb, k, hd), lambda i: (i, 0, 0)),
                   pl.BlockSpec((gb, k, 1), lambda i: (i, 0, 0)),
                   pl.BlockSpec((gb, 1, 2 * hd), lambda i: (i, 0, 0))),
        compiler_params=_mosaic_params(),
    )(a_ind, sl_col, sr_row, x_p, xw, b)


# --------------------------------------------------------------------------
# Kernel 3: fused structure learning + conv3(+relu) + readouts of x_pool2 and
#           conv3 output.  The learned adjacency and h3 never leave VMEM.
# --------------------------------------------------------------------------
def make_sl_conv_readout_kernel(lamb, neg_slope, inv_k, hid):
    def kernel(aind_ref, sl_ref, sr_ref, xp_ref, xw_ref, b_ref, r_ref):
        # structure learning (softmax; sparsemax TODO above applies here too)
        w = sl_ref[...] + sr_ref[...]
        w = jnp.where(w > 0, w, neg_slope * w)
        w = w + lamb * aind_ref[...].astype(F32)
        w = w - jnp.max(w, axis=-1, keepdims=True)
        e = jnp.exp(w)
        a_new = e * pl.reciprocal(jnp.sum(e, axis=-1, keepdims=True), approx=True)
        a_bf = a_new.astype(BF16)   # only needed for conv3 -> stays in VMEM

        # conv3 + relu (softmax diagonal > 0 -> no self-loop fill)
        rowsum = jnp.sum(a_new, axis=-1, keepdims=True)
        dinv = _dinv(rowsum)
        xw = xw_ref[...]
        agg = jnp.einsum('gij,gjh->gih', a_bf, (xw * dinv).astype(BF16),
                         preferred_element_type=jnp.float32)
        h3 = jnp.maximum(dinv * agg + b_ref[...], 0.0)

        # readouts: relu([gmp||gap](x_pool2)) + relu([gmp||gap](h3))
        xp = xp_ref[...]
        mx = (jnp.maximum(jnp.max(xp, axis=1, keepdims=True), 0.0)
              + jnp.maximum(jnp.max(h3, axis=1, keepdims=True), 0.0))
        av = (jnp.maximum(jnp.sum(xp, axis=1, keepdims=True) * inv_k, 0.0)
              + jnp.maximum(jnp.sum(h3, axis=1, keepdims=True) * inv_k, 0.0))
        r_ref[:, :, :hid] = mx
        r_ref[:, :, hid:] = av
    return kernel


def sl_conv_readout(a_ind, sl_col, sr_row, x_p, xw, b, lamb, graph_tile=None,
                    neg_slope=0.2):
    g, k, _ = a_ind.shape
    hd = xw.shape[-1]
    per_graph = 2 * k * k + 12 * k * hd + 8 * k + 8 * hd
    gb = _pick_graph_tile(g, per_graph, cap=graph_tile)
    kern = make_sl_conv_readout_kernel(float(lamb), float(neg_slope),
                                       1.0 / float(k), hd)
    return pl.pallas_call(
        kern,
        out_shape=jax.ShapeDtypeStruct((g, 1, 2 * hd), F32),
        grid=(g // gb,),
        in_specs=[
            pl.BlockSpec((gb, k, k), lambda i: (i, 0, 0)),
            pl.BlockSpec((gb, k, 1), lambda i: (i, 0, 0)),
            pl.BlockSpec((gb, 1, k), lambda i: (i, 0, 0)),
            pl.BlockSpec((gb, k, hd), lambda i: (i, 0, 0)),
            pl.BlockSpec((gb, k, hd), lambda i: (i, 0, 0)),
            pl.BlockSpec((1, 1, hd), lambda i: (0, 0, 0)),
        ],
        out_specs=pl.BlockSpec((gb, 1, 2 * hd), lambda i: (i, 0, 0)),
        compiler_params=_mosaic_params(),
    )(a_ind, sl_col, sr_row, x_p, xw, b)


# --------------------------------------------------------------------------
# Kernel 4: tiny dense head -- before_fc = relu(x1)+relu(x2)+relu(x3) (already
#           reduced per graph), lin1 -> relu -> lin2.
# --------------------------------------------------------------------------
def _head_kernel(r1_ref, r23_ref, w1_ref, b1_ref, w2_ref, b2_ref,
                 out_ref, pre_ref):
    pre = r1_ref[...] + r23_ref[...]
    pre_ref[...] = pre
    z = jnp.maximum(
        jnp.dot(pre, w1_ref[...], preferred_element_type=jnp.float32)
        + b1_ref[...], 0.0)
    # TODO(synk): F.dropout implemented with eval-mode (identity) semantics.
    out_ref[...] = (jnp.dot(z, w2_ref[...], preferred_element_type=jnp.float32)
                    + b2_ref[...])


def head(r1, r23, w1, b1, w2, b2):
    g, two_h = r1.shape
    return pl.pallas_call(
        _head_kernel,
        out_shape=(jax.ShapeDtypeStruct((g, w2.shape[1]), F32),
                   jax.ShapeDtypeStruct((g, two_h), F32)),
        in_specs=[pl.BlockSpec(memory_space=pltpu.MemorySpace.VMEM)
                  for _ in range(6)],
        out_specs=(pl.BlockSpec(memory_space=pltpu.MemorySpace.VMEM),
                   pl.BlockSpec(memory_space=pltpu.MemorySpace.VMEM)),
        compiler_params=pltpu.CompilerParams(vmem_limit_bytes=_VMEM_LIMIT),
    )(r1, r23, w1, b1, w2, b2)


# --------------------------------------------------------------------------
# JAX glue: per-graph top-k pooling selection + permutation gathers
# --------------------------------------------------------------------------
def topk_pool(score, h, a_bf, ratio):
    """Per-graph top-k node selection + induced sub-adjacency (data dependent).
    TODO(synk): the a[idx][:, idx] double gather could be fused into the SL
    kernel via PrefetchScalarGridSpec row gathers; kept as XLA gathers here.
    """
    g, n = score.shape
    k = int(math.ceil(ratio * n))
    idx = jnp.argsort(-score, axis=1)[:, :k]                       # [G, k]
    x_p = jnp.take_along_axis(h, idx[:, :, None], axis=1)          # [G, k, H]
    a_rows = jnp.take_along_axis(a_bf, idx[:, :, None], axis=1)    # [G, k, n]
    a_ind = jnp.take_along_axis(a_rows, idx[:, None, :], axis=2)   # [G, k, k]
    return x_p, a_ind, k


@partial(jax.jit, static_argnames=("pooling_ratio", "lamb", "graph_tile"))
def model_forward(params, x, a0, *, pooling_ratio, lamb, graph_tile=None):
    """HGP-SL Model.forward on dense, graph-blocked inputs.

    x  : [G, n, F] node features (equal-sized graphs)
    a0 : [G, n, n] per-graph dense adjacency (block-diagonal global adjacency)
    """
    g = x.shape[0]
    hd = params["w1"].shape[1]
    a0_bf = a0.astype(BF16)                 # adjacency streamed in bf16

    # conv1 + relu and pool1's information score (one fused kernel)
    xw1 = jnp.einsum('gnf,fh->gnh', x, params["w1"])          # hoisted X @ W
    h1, s1 = conv1_info(a0_bf, xw1, params["b1"].reshape(1, 1, hd), graph_tile)

    # pool1: per-graph top-k (data dependent -> XLA)
    x_p1, a_ind1, k1 = topk_pool(s1[:, :, 0], h1, a0_bf, pooling_ratio)

    # tiny hoisted projections for structure learning + conv2
    att1 = jnp.concatenate([params["att1_l"], params["att1_r"].T], axis=1)
    proj1 = jnp.einsum('gkh,hc->gkc', x_p1, att1)             # [G, k1, 2]
    sl1, sr1 = proj1[:, :, 0:1], jnp.transpose(proj1[:, :, 1:2], (0, 2, 1))
    xw2 = jnp.einsum('gkh,hc->gkc', x_p1, params["w2"])

    # fused: structure learning + conv2 + relu + info score + readout(x_p1)
    a1_bf, h2, s2, r1 = sl_conv_info(
        a_ind1, sl1, sr1, x_p1, xw2, params["b2"].reshape(1, 1, hd),
        lamb, graph_tile)

    # pool2
    x_p2, a_ind2, _ = topk_pool(s2[:, :, 0], h2, a1_bf, pooling_ratio)
    att2 = jnp.concatenate([params["att2_l"], params["att2_r"].T], axis=1)
    proj2 = jnp.einsum('gkh,hc->gkc', x_p2, att2)
    sl2, sr2 = proj2[:, :, 0:1], jnp.transpose(proj2[:, :, 1:2], (0, 2, 1))
    xw3 = jnp.einsum('gkh,hc->gkc', x_p2, params["w3"])

    # fused: structure learning + conv3 + relu + readouts(x_p2, h3)
    r23 = sl_conv_readout(
        a_ind2, sl2, sr2, x_p2, xw3, params["b3"].reshape(1, 1, hd),
        lamb, graph_tile)

    # tiny dense head: relu-sum of readouts -> lin1 -> relu -> lin2
    out, before_fc = head(r1.reshape(g, 2 * hd), r23.reshape(g, 2 * hd),
                          params["lin1_w"], params["lin1_b"],
                          params["lin2_w"], params["lin2_b"])
    return out, before_fc


# --------------------------------------------------------------------------
# main
# --------------------------------------------------------------------------
if __name__ == "__main__":
    num_features, nhid = 16, 32
    num_graphs, n_per = 2, 8           # 2 graphs x 8 nodes
    pooling_ratio, lamb = 0.5, 1.0

    key = jax.random.PRNGKey(0)
    ks = jax.random.split(key, 10)

    def init(k, shape, scale=0.1):
        return (scale * jax.random.normal(k, shape)).astype(F32)

    att1 = init(ks[3], (1, 2 * nhid))
    att2 = init(ks[4], (1, 2 * nhid))
    params = {
        "w1": init(ks[0], (num_features, nhid)), "b1": jnp.zeros((1, nhid), F32),
        "w2": init(ks[1], (nhid, nhid)),         "b2": jnp.zeros((1, nhid), F32),
        "w3": init(ks[2], (nhid, nhid)),         "b3": jnp.zeros((1, nhid), F32),
        "att1_l": att1[:, :nhid].T, "att1_r": att1[:, nhid:],
        "att2_l": att2[:, :nhid].T, "att2_r": att2[:, nhid:],
        "lin1_w": init(ks[5], (2 * nhid, nhid)), "lin1_b": jnp.zeros((1, nhid), F32),
        "lin2_w": init(ks[6], (nhid, nhid)),     "lin2_b": jnp.zeros((1, nhid), F32),
    }

    # node features, graph-blocked: [G, n, F]
    x = jax.random.normal(ks[7], (num_graphs, n_per, num_features)).astype(F32)

    # per-graph dense adjacency: ring + one chord (symmetric, no self loops);
    # second graph gets an extra chord so the two graphs differ.
    idx = jnp.arange(n_per)
    blk = jnp.zeros((n_per, n_per), F32).at[idx, (idx + 1) % n_per].set(1.0)
    blk = blk.at[0, n_per // 2].set(1.0)
    blk = jnp.clip(blk + blk.T, 0.0, 1.0)
    blk2 = jnp.clip(blk.at[1, n_per - 2].set(1.0).at[n_per - 2, 1].set(1.0),
                    0.0, 1.0)
    a0 = jnp.stack([blk, blk2], axis=0)

    out, before_fc = model_forward(params, x, a0,
                                   pooling_ratio=pooling_ratio, lamb=lamb,
                                   graph_tile=1)   # 1 graph / step -> grid > 1
    out = jax.block_until_ready(out)
    before_fc = jax.block_until_ready(before_fc)

    assert out.shape == (num_graphs, nhid)
    assert before_fc.shape == (num_graphs, 2 * nhid)
    assert bool(jnp.all(jnp.isfinite(out))) and bool(jnp.all(jnp.isfinite(before_fc)))
    print("KERNEL_OK")
</pallas_src>

<mosaic_0001>
module attributes {stable_mosaic.version = 11 : i64} {
  func.func @_conv1_info_kernel(%arg0: i32, %arg1: memref<1x8x8xbf16, #tpu.memory_space<vmem>>, %arg2: memref<1x8x32xf32, #tpu.memory_space<vmem>>, %arg3: memref<1x1x32xf32, #tpu.memory_space<vmem>>, %arg4: memref<1x8x32xf32, #tpu.memory_space<vmem>>, %arg5: memref<1x8x1xf32, #tpu.memory_space<vmem>>) attributes {dimension_semantics = [#tpu.dimension_semantics<parallel>], iteration_bounds = array<i64: 2>, scalar_prefetch = 0 : i64, scratch_operands = 0 : i64, tpu.core_type = #tpu.core_type<tc>, window_params = [{transform_indices = @transform_0, window_bounds = array<i64: 1, 8, 8>}, {transform_indices = @transform_1, window_bounds = array<i64: 1, 8, 32>}, {pipeline_mode = #tpu.pipeline_mode<synchronous>, transform_indices = @transform_2, window_bounds = array<i64: 1, 1, 32>}, {transform_indices = @transform_3, window_bounds = array<i64: 1, 8, 32>}, {transform_indices = @transform_4, window_bounds = array<i64: 1, 8, 1>}]} {
    %c0 = arith.constant 0 : index
    %c0_0 = arith.constant 0 : index
    %c0_1 = arith.constant 0 : index
    %0 = vector.load %arg1[%c0, %c0_0, %c0_1] : memref<1x8x8xbf16, #tpu.memory_space<vmem>>, vector<1x8x8xbf16>
    %1 = arith.extf %0 : vector<1x8x8xbf16> to vector<1x8x8xf32>
    %2 = tpu.iota {dimensions = array<i32: 1>} : vector<1x8x8xi32>
    %3 = tpu.iota {dimensions = array<i32: 2>} : vector<1x8x8xi32>
    %4 = arith.cmpi eq, %2, %3 : vector<1x8x8xi32>
    %cst = arith.constant dense<0.000000e+00> : vector<1x8xf32>
    %5 = vector.multi_reduction <add>, %1, %cst [2] : vector<1x8x8xf32> to vector<1x8xf32>
    %6 = vector.shape_cast %5 : vector<1x8xf32> to vector<1x8x1xf32>
    %cst_2 = arith.constant 0.000000e+00 : f32
    %7 = vector.broadcast %cst_2 : f32 to vector<1x8x8xf32>
    %8 = arith.select %4, %1, %7 : vector<1x8x8xi1>, vector<1x8x8xf32>
    %cst_3 = arith.constant dense<0.000000e+00> : vector<1x8xf32>
    %9 = vector.multi_reduction <add>, %8, %cst_3 [2] : vector<1x8x8xf32> to vector<1x8xf32>
    %10 = vector.shape_cast %9 : vector<1x8xf32> to vector<1x8x1xf32>
    %cst_4 = arith.constant 0.000000e+00 : f32
    %11 = vector.broadcast %cst_4 : f32 to vector<1x8x1xf32>
    %12 = arith.cmpf oeq, %10, %11 : vector<1x8x1xf32>
    %cst_5 = arith.constant 1.000000e+00 : f32
    %cst_6 = arith.constant 0.000000e+00 : f32
    %13 = vector.broadcast %cst_5 : f32 to vector<1x8x1xf32>
    %14 = vector.broadcast %cst_6 : f32 to vector<1x8x1xf32>
    %15 = arith.select %12, %13, %14 : vector<1x8x1xi1>, vector<1x8x1xf32>
    %16 = arith.addf %6, %15 : vector<1x8x1xf32>
    %cst_7 = arith.constant 0.000000e+00 : f32
    %17 = vector.broadcast %cst_7 : f32 to vector<1x8x1xf32>
    %18 = arith.cmpf ogt, %16, %17 : vector<1x8x1xf32>
    %cst_8 = arith.constant 9.99999996E-13 : f32
    %19 = vector.broadcast %cst_8 : f32 to vector<1x8x1xf32>
    %20 = arith.maximumf %16, %19 : vector<1x8x1xf32>
    %21 = math.rsqrt %20 : vector<1x8x1xf32>
    %cst_9 = arith.constant 0.000000e+00 : f32
    %22 = vector.broadcast %cst_9 : f32 to vector<1x8x1xf32>
    %23 = arith.select %18, %21, %22 : vector<1x8x1xi1>, vector<1x8x1xf32>
    %cst_10 = arith.constant 0.000000e+00 : f32
    %24 = vector.broadcast %cst_10 : f32 to vector<1x8x1xf32>
    %25 = arith.cmpf ogt, %6, %24 : vector<1x8x1xf32>
    %cst_11 = arith.constant 9.99999996E-13 : f32
    %26 = vector.broadcast %cst_11 : f32 to vector<1x8x1xf32>
    %27 = arith.maximumf %6, %26 : vector<1x8x1xf32>
    %28 = math.rsqrt %27 : vector<1x8x1xf32>
    %cst_12 = arith.constant 0.000000e+00 : f32
    %29 = vector.broadcast %cst_12 : f32 to vector<1x8x1xf32>
    %30 = arith.select %25, %28, %29 : vector<1x8x1xi1>, vector<1x8x1xf32>
    %c0_13 = arith.constant 0 : index
    %c0_14 = arith.constant 0 : index
    %c0_15 = arith.constant 0 : index
    %31 = vector.load %arg2[%c0_13, %c0_14, %c0_15] : memref<1x8x32xf32, #tpu.memory_space<vmem>>, vector<1x8x32xf32>
    %32 = vector.broadcast %23 : vector<1x8x1xf32> to vector<1x8x32xf32>
    %33 = arith.mulf %31, %32 : vector<1x8x32xf32>
    %34 = arith.truncf %33 : vector<1x8x32xf32> to vector<1x8x32xbf16>
    "tpu.trace_start"() <{level = 10 : i32, message = "gij,gjh->gih"}> : () -> ()
    %cst_16 = arith.constant dense<0.000000e+00> : vector<1x8x32xf32>
    %35 = tpu.matmul %0, %34, %cst_16 {dimension_numbers = #tpu.dot_dimension_numbers<[2], [1], [1], [2], [0, 0, 0, 1, 1, 2], [0], [0]>} : vector<1x8x8xbf16>, vector<1x8x32xbf16>, vector<1x8x32xf32> -> vector<1x8x32xf32>
    "tpu.trace_stop"() : () -> ()
    %36 = vector.broadcast %23 : vector<1x8x1xf32> to vector<1x8x32xf32>
    %37 = arith.mulf %36, %35 : vector<1x8x32xf32>
    %38 = arith.mulf %15, %23 : vector<1x8x1xf32>
    %39 = arith.mulf %38, %23 : vector<1x8x1xf32>
    %40 = vector.broadcast %39 : vector<1x8x1xf32> to vector<1x8x32xf32>
    %41 = arith.mulf %40, %31 : vector<1x8x32xf32>
    %42 = arith.addf %37, %41 : vector<1x8x32xf32>
    %c0_17 = arith.constant 0 : index
    %c0_18 = arith.constant 0 : index
    %c0_19 = arith.constant 0 : index
    %43 = vector.load %arg3[%c0_17, %c0_18, %c0_19] : memref<1x1x32xf32, #tpu.memory_space<vmem>>, vector<1x1x32xf32>
    %44 = vector.broadcast %43 : vector<1x1x32xf32> to vector<1x8x32xf32>
    %45 = arith.addf %42, %44 : vector<1x8x32xf32>
    %cst_20 = arith.constant 0.000000e+00 : f32
    %46 = vector.broadcast %cst_20 : f32 to vector<1x8x32xf32>
    %47 = arith.maximumf %45, %46 : vector<1x8x32xf32>
    %c0_21 = arith.constant 0 : index
    %c0_22 = arith.constant 0 : index
    %c0_23 = arith.constant 0 : index
    %48 = vector.load %arg4[%c0_21, %c0_22, %c0_23] : memref<1x8x32xf32, #tpu.memory_space<vmem>>, vector<1x8x32xf32>
    tpu.vector_store %arg4[%c0_21, %c0_22, %c0_23], %47 {strides = array<i32>} : memref<1x8x32xf32, #tpu.memory_space<vmem>>, vector<1x8x32xf32>,
    %49 = vector.broadcast %30 : vector<1x8x1xf32> to vector<1x8x32xf32>
    %50 = arith.mulf %47, %49 : vector<1x8x32xf32>
    %51 = arith.truncf %50 : vector<1x8x32xf32> to vector<1x8x32xbf16>
    "tpu.trace_start"() <{level = 10 : i32, message = "gij,gjh->gih"}> : () -> ()
    %cst_24 = arith.constant dense<0.000000e+00> : vector<1x8x32xf32>
    %52 = tpu.matmul %0, %51, %cst_24 {dimension_numbers = #tpu.dot_dimension_numbers<[2], [1], [1], [2], [0, 0, 0, 1, 1, 2], [0], [0]>} : vector<1x8x8xbf16>, vector<1x8x32xbf16>, vector<1x8x32xf32> -> vector<1x8x32xf32>
    "tpu.trace_stop"() : () -> ()
    %53 = vector.broadcast %30 : vector<1x8x1xf32> to vector<1x8x32xf32>
    %54 = arith.mulf %53, %52 : vector<1x8x32xf32>
    %55 = arith.subf %47, %54 : vector<1x8x32xf32>
    %56 = math.absf %55 : vector<1x8x32xf32>
    %cst_25 = arith.constant dense<0.000000e+00> : vector<1x8xf32>
    %57 = vector.multi_reduction <add>, %56, %cst_25 [2] : vector<1x8x32xf32> to vector<1x8xf32>
    %58 = vector.shape_cast %57 : vector<1x8xf32> to vector<1x8x1xf32>
    %c0_26 = arith.constant 0 : index
    %c0_27 = arith.constant 0 : index
    %c0_28 = arith.constant 0 : index
    %59 = vector.load %arg5[%c0_26, %c0_27, %c0_28] : memref<1x8x1xf32, #tpu.memory_space<vmem>>, vector<1x8x1xf32>
    tpu.vector_store %arg5[%c0_26, %c0_27, %c0_28], %58 {strides = array<i32>} : memref<1x8x1xf32, #tpu.memory_space<vmem>>, vector<1x8x1xf32>,
    return
  }
  func.func @transform_0(%arg0: i32) -> (i32, i32, i32) {
    %c0_i32 = arith.constant 0 : i32
    %c0_i32_0 = arith.constant 0 : i32
    %c0_i32_1 = arith.constant 0 : i32
    return %arg0, %c0_i32, %c0_i32_0 : i32, i32, i32
  }
  func.func @transform_1(%arg0: i32) -> (i32, i32, i32) {
    %c0_i32 = arith.constant 0 : i32
    %c0_i32_0 = arith.constant 0 : i32
    %c0_i32_1 = arith.constant 0 : i32
    return %arg0, %c0_i32, %c0_i32_0 : i32, i32, i32
  }
  func.func @transform_2(%arg0: i32) -> (i32, i32, i32) {
    %c0_i32 = arith.constant 0 : i32
    %c0_i32_0 = arith.constant 0 : i32
    %c0_i32_1 = arith.constant 0 : i32
    %c0_i32_2 = arith.constant 0 : i32
    return %c0_i32, %c0_i32_0, %c0_i32_1 : i32, i32, i32
  }
  func.func @transform_3(%arg0: i32) -> (i32, i32, i32) {
    %c0_i32 = arith.constant 0 : i32
    %c0_i32_0 = arith.constant 0 : i32
    %c0_i32_1 = arith.constant 0 : i32
    return %arg0, %c0_i32, %c0_i32_0 : i32, i32, i32
  }
  func.func @transform_4(%arg0: i32) -> (i32, i32, i32) {
    %c0_i32 = arith.constant 0 : i32
    %c0_i32_0 = arith.constant 0 : i32
    %c0_i32_1 = arith.constant 0 : i32
    return %arg0, %c0_i32, %c0_i32_0 : i32, i32, i32
  }
}

module attributes {stable_mosaic.version = 11 : i64} {
  func.func @kernel(%arg0: i32, %arg1: memref<1x4x4xbf16, #tpu.memory_space<vmem>>, %arg2: memref<1x4x1xf32, #tpu.memory_space<vmem>>, %arg3: memref<1x1x4xf32, #tpu.memory_space<vmem>>, %arg4: memref<1x4x32xf32, #tpu.memory_space<vmem>>, %arg5: memref<1x4x32xf32, #tpu.memory_space<vmem>>, %arg6: memref<1x1x32xf32, #tpu.memory_space<vmem>>, %arg7: memref<1x4x4xbf16, #tpu.memory_space<vmem>>, %arg8: memref<1x4x32xf32, #tpu.memory_space<vmem>>, %arg9: memref<1x4x1xf32, #tpu.memory_space<vmem>>, %arg10: memref<1x1x64xf32, #tpu.memory_space<vmem>>) attributes {dimension_semantics = [#tpu.dimension_semantics<parallel>], iteration_bounds = array<i64: 2>, scalar_prefetch = 0 : i64, scratch_operands = 0 : i64, tpu.core_type = #tpu.core_type<tc>, window_params = [{transform_indices = @transform_0, window_bounds = array<i64: 1, 4, 4>}, {transform_indices = @transform_1, window_bounds = array<i64: 1, 4, 1>}, {transform_indices = @transform_2, window_bounds = array<i64: 1, 1, 4>}, {transform_indices = @transform_3, window_bounds = array<i64: 1, 4, 32>}, {transform_indices = @transform_4, window_bounds = array<i64: 1, 4, 32>}, {pipeline_mode = #tpu.pipeline_mode<synchronous>, transform_indices = @transform_5, window_bounds = array<i64: 1, 1, 32>}, {transform_indices = @transform_6, window_bounds = array<i64: 1, 4, 4>}, {transform_indices = @transform_7, window_bounds = array<i64: 1, 4, 32>}, {transform_indices = @transform_8, window_bounds = array<i64: 1, 4, 1>}, {transform_indices = @transform_9, window_bounds = array<i64: 1, 1, 64>}]} {
    %c0 = arith.constant 0 : index
    %c0_0 = arith.constant 0 : index
    %c0_1 = arith.constant 0 : index
    %0 = vector.load %arg2[%c0, %c0_0, %c0_1] : memref<1x4x1xf32, #tpu.memory_space<vmem>>, vector<1x4x1xf32>
    %c0_2 = arith.constant 0 : index
    %c0_3 = arith.constant 0 : index
    %c0_4 = arith.constant 0 : index
    %1 = vector.load %arg3[%c0_2, %c0_3, %c0_4] : memref<1x1x4xf32, #tpu.memory_space<vmem>>, vector<1x1x4xf32>
    %2 = vector.broadcast %0 : vector<1x4x1xf32> to vector<1x4x4xf32>
    %3 = vector.broadcast %1 : vector<1x1x4xf32> to vector<1x4x4xf32>
    %4 = arith.addf %2, %3 : vector<1x4x4xf32>
    %cst = arith.constant 0.000000e+00 : f32
    %5 = vector.broadcast %cst : f32 to vector<1x4x4xf32>
    %6 = arith.cmpf ogt, %4, %5 : vector<1x4x4xf32>
    %cst_5 = arith.constant 2.000000e-01 : f32
    %7 = vector.broadcast %cst_5 : f32 to vector<1x4x4xf32>
    %8 = arith.mulf %7, %4 : vector<1x4x4xf32>
    %9 = arith.select %6, %4, %8 : vector<1x4x4xi1>, vector<1x4x4xf32>
    %c0_6 = arith.constant 0 : index
    %c0_7 = arith.constant 0 : index
    %c0_8 = arith.constant 0 : index
    %10 = vector.load %arg1[%c0_6, %c0_7, %c0_8] : memref<1x4x4xbf16, #tpu.memory_space<vmem>>, vector<1x4x4xbf16>
    %11 = arith.extf %10 : vector<1x4x4xbf16> to vector<1x4x4xf32>
    %cst_9 = arith.constant 1.000000e+00 : f32
    %12 = vector.broadcast %cst_9 : f32 to vector<1x4x4xf32>
    %13 = arith.mulf %12, %11 : vector<1x4x4xf32>
    %14 = arith.addf %9, %13 : vector<1x4x4xf32>
    %cst_10 = arith.constant dense<0xFF800000> : vector<1x4xf32>
    %15 = vector.multi_reduction <maximumf>, %14, %cst_10 [2] : vector<1x4x4xf32> to vector<1x4xf32>
    %16 = vector.shape_cast %15 : vector<1x4xf32> to vector<1x4x1xf32>
    %17 = vector.broadcast %16 : vector<1x4x1xf32> to vector<1x4x4xf32>
    %18 = arith.subf %14, %17 : vector<1x4x4xf32>
    %19 = math.exp %18 : vector<1x4x4xf32>
    %cst_11 = arith.constant dense<0.000000e+00> : vector<1x4xf32>
    %20 = vector.multi_reduction <add>, %19, %cst_11 [2] : vector<1x4x4xf32> to vector<1x4xf32>
    %21 = vector.shape_cast %20 : vector<1x4xf32> to vector<1x4x1xf32>
    %22 = tpu.reciprocal %21 {approx = true} : vector<1x4x1xf32> -> vector<1x4x1xf32>
    %23 = vector.broadcast %22 : vector<1x4x1xf32> to vector<1x4x4xf32>
    %24 = arith.mulf %19, %23 : vector<1x4x4xf32>
    %25 = arith.truncf %24 : vector<1x4x4xf32> to vector<1x4x4xbf16>
    %c0_12 = arith.constant 0 : index
    %c0_13 = arith.constant 0 : index
    %c0_14 = arith.constant 0 : index
    %26 = vector.load %arg7[%c0_12, %c0_13, %c0_14] : memref<1x4x4xbf16, #tpu.memory_space<vmem>>, vector<1x4x4xbf16>
    tpu.vector_store %arg7[%c0_12, %c0_13, %c0_14], %25 {strides = array<i32>} : memref<1x4x4xbf16, #tpu.memory_space<vmem>>, vector<1x4x4xbf16>,
    %cst_15 = arith.constant dense<0.000000e+00> : vector<1x4xf32>
    %27 = vector.multi_reduction <add>, %24, %cst_15 [2] : vector<1x4x4xf32> to vector<1x4xf32>
    %28 = vector.shape_cast %27 : vector<1x4xf32> to vector<1x4x1xf32>
    %cst_16 = arith.constant 0.000000e+00 : f32
    %29 = vector.broadcast %cst_16 : f32 to vector<1x4x1xf32>
    %30 = arith.cmpf ogt, %28, %29 : vector<1x4x1xf32>
    %cst_17 = arith.constant 9.99999996E-13 : f32
    %31 = vector.broadcast %cst_17 : f32 to vector<1x4x1xf32>
    %32 = arith.maximumf %28, %31 : vector<1x4x1xf32>
    %33 = math.rsqrt %32 : vector<1x4x1xf32>
    %cst_18 = arith.constant 0.000000e+00 : f32
    %34 = vector.broadcast %cst_18 : f32 to vector<1x4x1xf32>
    %35 = arith.select %30, %33, %34 : vector<1x4x1xi1>, vector<1x4x1xf32>
    %c0_19 = arith.constant 0 : index
    %c0_20 = arith.constant 0 : index
    %c0_21 = arith.constant 0 : index
    %36 = vector.load %arg5[%c0_19, %c0_20, %c0_21] : memref<1x4x32xf32, #tpu.memory_space<vmem>>, vector<1x4x32xf32>
    %37 = vector.broadcast %35 : vector<1x4x1xf32> to vector<1x4x32xf32>
    %38 = arith.mulf %36, %37 : vector<1x4x32xf32>
    %39 = arith.truncf %38 : vector<1x4x32xf32> to vector<1x4x32xbf16>
    "tpu.trace_start"() <{level = 10 : i32, message = "gij,gjh->gih"}> : () -> ()
    %cst_22 = arith.constant dense<0.000000e+00> : vector<1x4x32xf32>
    %40 = tpu.matmul %25, %39, %cst_22 {dimension_numbers = #tpu.dot_dimension_numbers<[2], [1], [1], [2], [0, 0, 0, 1, 1, 2], [0], [0]>} : vector<1x4x4xbf16>, vector<1x4x32xbf16>, vector<1x4x32xf32> -> vector<1x4x32xf32>
    "tpu.trace_stop"() : () -> ()
    %41 = vector.broadcast %35 : vector<1x4x1xf32> to vector<1x4x32xf32>
    %42 = arith.mulf %41, %40 : vector<1x4x32xf32>
    %c0_23 = arith.constant 0 : index
    %c0_24 = arith.constant 0 : index
    %c0_25 = arith.constant 0 : index
    %43 = vector.load %arg6[%c0_23, %c0_24, %c0_25] : memref<1x1x32xf32, #tpu.memory_space<vmem>>, vector<1x1x32xf32>
    %44 = vector.broadcast %43 : vector<1x1x32xf32> to vector<1x4x32xf32>
    %45 = arith.addf %42, %44 : vector<1x4x32xf32>
    %cst_26 = arith.constant 0.000000e+00 : f32
    %46 = vector.broadcast %cst_26 : f32 to vector<1x4x32xf32>
    %47 = arith.maximumf %45, %46 : vector<1x4x32xf32>
    %c0_27 = arith.constant 0 : index
    %c0_28 = arith.constant 0 : index
    %c0_29 = arith.constant 0 : index
    %48 = vector.load %arg8[%c0_27, %c0_28, %c0_29] : memref<1x4x32xf32, #tpu.memory_space<vmem>>, vector<1x4x32xf32>
    tpu.vector_store %arg8[%c0_27, %c0_28, %c0_29], %47 {strides = array<i32>} : memref<1x4x32xf32, #tpu.memory_space<vmem>>, vector<1x4x32xf32>,
    %49 = vector.broadcast %35 : vector<1x4x1xf32> to vector<1x4x32xf32>
    %50 = arith.mulf %47, %49 : vector<1x4x32xf32>
    %51 = arith.truncf %50 : vector<1x4x32xf32> to vector<1x4x32xbf16>
    "tpu.trace_start"() <{level = 10 : i32, message = "gij,gjh->gih"}> : () -> ()
    %cst_30 = arith.constant dense<0.000000e+00> : vector<1x4x32xf32>
    %52 = tpu.matmul %25, %51, %cst_30 {dimension_numbers = #tpu.dot_dimension_numbers<[2], [1], [1], [2], [0, 0, 0, 1, 1, 2], [0], [0]>} : vector<1x4x4xbf16>, vector<1x4x32xbf16>, vector<1x4x32xf32> -> vector<1x4x32xf32>
    "tpu.trace_stop"() : () -> ()
    %53 = vector.broadcast %35 : vector<1x4x1xf32> to vector<1x4x32xf32>
    %54 = arith.mulf %53, %52 : vector<1x4x32xf32>
    %55 = arith.subf %47, %54 : vector<1x4x32xf32>
    %56 = math.absf %55 : vector<1x4x32xf32>
    %cst_31 = arith.constant dense<0.000000e+00> : vector<1x4xf32>
    %57 = vector.multi_reduction <add>, %56, %cst_31 [2] : vector<1x4x32xf32> to vector<1x4xf32>
    %58 = vector.shape_cast %57 : vector<1x4xf32> to vector<1x4x1xf32>
    %c0_32 = arith.constant 0 : index
    %c0_33 = arith.constant 0 : index
    %c0_34 = arith.constant 0 : index
    %59 = vector.load %arg9[%c0_32, %c0_33, %c0_34] : memref<1x4x1xf32, #tpu.memory_space<vmem>>, vector<1x4x1xf32>
    tpu.vector_store %arg9[%c0_32, %c0_33, %c0_34], %58 {strides = array<i32>} : memref<1x4x1xf32, #tpu.memory_space<vmem>>, vector<1x4x1xf32>,
    %c0_35 = arith.constant 0 : index
    %c0_36 = arith.constant 0 : index
    %c0_37 = arith.constant 0 : index
    %60 = vector.load %arg4[%c0_35, %c0_36, %c0_37] : memref<1x4x32xf32, #tpu.memory_space<vmem>>, vector<1x4x32xf32>
    %cst_38 = arith.constant dense<0xFF800000> : vector<1x32xf32>
    %61 = vector.multi_reduction <maximumf>, %60, %cst_38 [1] : vector<1x4x32xf32> to vector<1x32xf32>
    %62 = vector.shape_cast %61 : vector<1x32xf32> to vector<1x1x32xf32>
    %cst_39 = arith.constant 0.000000e+00 : f32
    %63 = vector.broadcast %cst_39 : f32 to vector<1x1x32xf32>
    %64 = arith.maximumf %62, %63 : vector<1x1x32xf32>
    %c0_40 = arith.constant 0 : index
    %c0_41 = arith.constant 0 : index
    %c0_42 = arith.constant 0 : index
    %65 = vector.load %arg10[%c0_40, %c0_41, %c0_42] : memref<1x1x64xf32, #tpu.memory_space<vmem>>, vector<1x1x32xf32>
    tpu.vector_store %arg10[%c0_40, %c0_41, %c0_42], %64 {strides = array<i32>} : memref<1x1x64xf32, #tpu.memory_space<vmem>>, vector<1x1x32xf32>,
    %cst_43 = arith.constant dense<0.000000e+00> : vector<1x32xf32>
    %66 = vector.multi_reduction <add>, %60, %cst_43 [1] : vector<1x4x32xf32> to vector<1x32xf32>
    %67 = vector.shape_cast %66 : vector<1x32xf32> to vector<1x1x32xf32>
    %cst_44 = arith.constant 2.500000e-01 : f32
    %68 = vector.broadcast %cst_44 : f32 to vector<1x1x32xf32>
    %69 = arith.mulf %67, %68 : vector<1x1x32xf32>
    %cst_45 = arith.constant 0.000000e+00 : f32
    %70 = vector.broadcast %cst_45 : f32 to vector<1x1x32xf32>
    %71 = arith.maximumf %69, %70 : vector<1x1x32xf32>
    %c0_46 = arith.constant 0 : index
    %c0_47 = arith.constant 0 : index
    %c32 = arith.constant 32 : index
    %72 = vector.load %arg10[%c0_46, %c0_47, %c32] : memref<1x1x64xf32, #tpu.memory_space<vmem>>, vector<1x1x32xf32>
    tpu.vector_store %arg10[%c0_46, %c0_47, %c32], %71 {strides = array<i32>} : memref<1x1x64xf32, #tpu.memory_space<vmem>>, vector<1x1x32xf32>,
    return
  }
  func.func @transform_0(%arg0: i32) -> (i32, i32, i32) {
    %c0_i32 = arith.constant 0 : i32
    %c0_i32_0 = arith.constant 0 : i32
    %c0_i32_1 = arith.constant 0 : i32
    return %arg0, %c0_i32, %c0_i32_0 : i32, i32, i32
  }
  func.func @transform_1(%arg0: i32) -> (i32, i32, i32) {
    %c0_i32 = arith.constant 0 : i32
    %c0_i32_0 = arith.constant 0 : i32
    %c0_i32_1 = arith.constant 0 : i32
    return %arg0, %c0_i32, %c0_i32_0 : i32, i32, i32
  }
  func.func @transform_2(%arg0: i32) -> (i32, i32, i32) {
    %c0_i32 = arith.constant 0 : i32
    %c0_i32_0 = arith.constant 0 : i32
    %c0_i32_1 = arith.constant 0 : i32
    return %arg0, %c0_i32, %c0_i32_0 : i32, i32, i32
  }
  func.func @transform_3(%arg0: i32) -> (i32, i32, i32) {
    %c0_i32 = arith.constant 0 : i32
    %c0_i32_0 = arith.constant 0 : i32
    %c0_i32_1 = arith.constant 0 : i32
    return %arg0, %c0_i32, %c0_i32_0 : i32, i32, i32
  }
  func.func @transform_4(%arg0: i32) -> (i32, i32, i32) {
    %c0_i32 = arith.constant 0 : i32
    %c0_i32_0 = arith.constant 0 : i32
    %c0_i32_1 = arith.constant 0 : i32
    return %arg0, %c0_i32, %c0_i32_0 : i32, i32, i32
  }
  func.func @transform_5(%arg0: i32) -> (i32, i32, i32) {
    %c0_i32 = arith.constant 0 : i32
    %c0_i32_0 = arith.constant 0 : i32
    %c0_i32_1 = arith.constant 0 : i32
    %c0_i32_2 = arith.constant 0 : i32
    return %c0_i32, %c0_i32_0, %c0_i32_1 : i32, i32, i32
  }
  func.func @transform_6(%arg0: i32) -> (i32, i32, i32) {
    %c0_i32 = arith.constant 0 : i32
    %c0_i32_0 = arith.constant 0 : i32
    %c0_i32_1 = arith.constant 0 : i32
    return %arg0, %c0_i32, %c0_i32_0 : i32, i32, i32
  }
  func.func @transform_7(%arg0: i32) -> (i32, i32, i32) {
    %c0_i32 = arith.constant 0 : i32
    %c0_i32_0 = arith.constant 0 : i32
    %c0_i32_1 = arith.constant 0 : i32
    return %arg0, %c0_i32, %c0_i32_0 : i32, i32, i32
  }
  func.func @transform_8(%arg0: i32) -> (i32, i32, i32) {
    %c0_i32 = arith.constant 0 : i32
    %c0_i32_0 = arith.constant 0 : i32
    %c0_i32_1 = arith.constant 0 : i32
    return %arg0, %c0_i32, %c0_i32_0 : i32, i32, i32
  }
  func.func @transform_9(%arg0: i32) -> (i32, i32, i32) {
    %c0_i32 = arith.constant 0 : i32
    %c0_i32_0 = arith.constant 0 : i32
    %c0_i32_1 = arith.constant 0 : i32
    return %arg0, %c0_i32, %c0_i32_0 : i32, i32, i32
  }
}

module attributes {stable_mosaic.version = 11 : i64} {
  func.func @_head_kernel(%arg0: memref<2x64xf32, #tpu.memory_space<vmem>>, %arg1: memref<2x64xf32, #tpu.memory_space<vmem>>, %arg2: memref<64x32xf32, #tpu.memory_space<vmem>>, %arg3: memref<1x32xf32, #tpu.memory_space<vmem>>, %arg4: memref<32x32xf32, #tpu.memory_space<vmem>>, %arg5: memref<1x32xf32, #tpu.memory_space<vmem>>, %arg6: memref<2x32xf32, #tpu.memory_space<vmem>>, %arg7: memref<2x64xf32, #tpu.memory_space<vmem>>) attributes {dimension_semantics = [], scalar_prefetch = 0 : i64, scratch_operands = 0 : i64, tpu.core_type = #tpu.core_type<tc>} {
    %c0 = arith.constant 0 : index
    %c0_0 = arith.constant 0 : index
    %0 = vector.load %arg0[%c0, %c0_0] : memref<2x64xf32, #tpu.memory_space<vmem>>, vector<2x64xf32>
    %c0_1 = arith.constant 0 : index
    %c0_2 = arith.constant 0 : index
    %1 = vector.load %arg1[%c0_1, %c0_2] : memref<2x64xf32, #tpu.memory_space<vmem>>, vector<2x64xf32>
    %2 = arith.addf %0, %1 : vector<2x64xf32>
    %c0_3 = arith.constant 0 : index
    %c0_4 = arith.constant 0 : index
    %3 = vector.load %arg7[%c0_3, %c0_4] : memref<2x64xf32, #tpu.memory_space<vmem>>, vector<2x64xf32>
    tpu.vector_store %arg7[%c0_3, %c0_4], %2 {strides = array<i32>} : memref<2x64xf32, #tpu.memory_space<vmem>>, vector<2x64xf32>,
    %c0_5 = arith.constant 0 : index
    %c0_6 = arith.constant 0 : index
    %4 = vector.load %arg2[%c0_5, %c0_6] : memref<64x32xf32, #tpu.memory_space<vmem>>, vector<64x32xf32>
    %cst = arith.constant dense<0.000000e+00> : vector<2x32xf32>
    %5 = tpu.matmul %2, %4, %cst {dimension_numbers = #tpu.dot_dimension_numbers<[1], [0], [0], [1], [0, 0, 1, 1], [], []>} : vector<2x64xf32>, vector<64x32xf32>, vector<2x32xf32> -> vector<2x32xf32>
    %c0_7 = arith.constant 0 : index
    %c0_8 = arith.constant 0 : index
    %6 = vector.load %arg3[%c0_7, %c0_8] : memref<1x32xf32, #tpu.memory_space<vmem>>, vector<1x32xf32>
    %7 = vector.broadcast %6 : vector<1x32xf32> to vector<2x32xf32>
    %8 = arith.addf %5, %7 : vector<2x32xf32>
    %cst_9 = arith.constant 0.000000e+00 : f32
    %9 = vector.broadcast %cst_9 : f32 to vector<2x32xf32>
    %10 = arith.maximumf %8, %9 : vector<2x32xf32>
    %c0_10 = arith.constant 0 : index
    %c0_11 = arith.constant 0 : index
    %11 = vector.load %arg4[%c0_10, %c0_11] : memref<32x32xf32, #tpu.memory_space<vmem>>, vector<32x32xf32>
    %cst_12 = arith.constant dense<0.000000e+00> : vector<2x32xf32>
    %12 = tpu.matmul %10, %11, %cst_12 {dimension_numbers = #tpu.dot_dimension_numbers<[1], [0], [0], [1], [0, 0, 1, 1], [], []>} : vector<2x32xf32>, vector<32x32xf32>, vector<2x32xf32> -> vector<2x32xf32>
    %c0_13 = arith.constant 0 : index
    %c0_14 = arith.constant 0 : index
    %13 = vector.load %arg5[%c0_13, %c0_14] : memref<1x32xf32, #tpu.memory_space<vmem>>, vector<1x32xf32>
    %14 = vector.broadcast %13 : vector<1x32xf32> to vector<2x32xf32>
    %15 = arith.addf %12, %14 : vector<2x32xf32>
    %c0_15 = arith.constant 0 : index
    %c0_16 = arith.constant 0 : index
    %16 = vector.load %arg6[%c0_15, %c0_16] : memref<2x32xf32, #tpu.memory_space<vmem>>, vector<2x32xf32>
    tpu.vector_store %arg6[%c0_15, %c0_16], %15 {strides = array<i32>} : memref<2x32xf32, #tpu.memory_space<vmem>>, vector<2x32xf32>,
    return
  }
}

module attributes {stable_mosaic.version = 11 : i64} {
  func.func @kernel(%arg0: i32, %arg1: memref<1x2x2xbf16, #tpu.memory_space<vmem>>, %arg2: memref<1x2x1xf32, #tpu.memory_space<vmem>>, %arg3: memref<1x1x2xf32, #tpu.memory_space<vmem>>, %arg4: memref<1x2x32xf32, #tpu.memory_space<vmem>>, %arg5: memref<1x2x32xf32, #tpu.memory_space<vmem>>, %arg6: memref<1x1x32xf32, #tpu.memory_space<vmem>>, %arg7: memref<1x1x64xf32, #tpu.memory_space<vmem>>) attributes {dimension_semantics = [#tpu.dimension_semantics<parallel>], iteration_bounds = array<i64: 2>, scalar_prefetch = 0 : i64, scratch_operands = 0 : i64, tpu.core_type = #tpu.core_type<tc>, window_params = [{transform_indices = @transform_0, window_bounds = array<i64: 1, 2, 2>}, {transform_indices = @transform_1, window_bounds = array<i64: 1, 2, 1>}, {transform_indices = @transform_2, window_bounds = array<i64: 1, 1, 2>}, {transform_indices = @transform_3, window_bounds = array<i64: 1, 2, 32>}, {transform_indices = @transform_4, window_bounds = array<i64: 1, 2, 32>}, {pipeline_mode = #tpu.pipeline_mode<synchronous>, transform_indices = @transform_5, window_bounds = array<i64: 1, 1, 32>}, {transform_indices = @transform_6, window_bounds = array<i64: 1, 1, 64>}]} {
    %c0 = arith.constant 0 : index
    %c0_0 = arith.constant 0 : index
    %c0_1 = arith.constant 0 : index
    %0 = vector.load %arg2[%c0, %c0_0, %c0_1] : memref<1x2x1xf32, #tpu.memory_space<vmem>>, vector<1x2x1xf32>
    %c0_2 = arith.constant 0 : index
    %c0_3 = arith.constant 0 : index
    %c0_4 = arith.constant 0 : index
    %1 = vector.load %arg3[%c0_2, %c0_3, %c0_4] : memref<1x1x2xf32, #tpu.memory_space<vmem>>, vector<1x1x2xf32>
    %2 = vector.broadcast %0 : vector<1x2x1xf32> to vector<1x2x2xf32>
    %3 = vector.broadcast %1 : vector<1x1x2xf32> to vector<1x2x2xf32>
    %4 = arith.addf %2, %3 : vector<1x2x2xf32>
    %cst = arith.constant 0.000000e+00 : f32
    %5 = vector.broadcast %cst : f32 to vector<1x2x2xf32>
    %6 = arith.cmpf ogt, %4, %5 : vector<1x2x2xf32>
    %cst_5 = arith.constant 2.000000e-01 : f32
    %7 = vector.broadcast %cst_5 : f32 to vector<1x2x2xf32>
    %8 = arith.mulf %7, %4 : vector<1x2x2xf32>
    %9 = arith.select %6, %4, %8 : vector<1x2x2xi1>, vector<1x2x2xf32>
    %c0_6 = arith.constant 0 : index
    %c0_7 = arith.constant 0 : index
    %c0_8 = arith.constant 0 : index
    %10 = vector.load %arg1[%c0_6, %c0_7, %c0_8] : memref<1x2x2xbf16, #tpu.memory_space<vmem>>, vector<1x2x2xbf16>
    %11 = arith.extf %10 : vector<1x2x2xbf16> to vector<1x2x2xf32>
    %cst_9 = arith.constant 1.000000e+00 : f32
    %12 = vector.broadcast %cst_9 : f32 to vector<1x2x2xf32>
    %13 = arith.mulf %12, %11 : vector<1x2x2xf32>
    %14 = arith.addf %9, %13 : vector<1x2x2xf32>
    %cst_10 = arith.constant dense<0xFF800000> : vector<1x2xf32>
    %15 = vector.multi_reduction <maximumf>, %14, %cst_10 [2] : vector<1x2x2xf32> to vector<1x2xf32>
    %16 = vector.shape_cast %15 : vector<1x2xf32> to vector<1x2x1xf32>
    %17 = vector.broadcast %16 : vector<1x2x1xf32> to vector<1x2x2xf32>
    %18 = arith.subf %14, %17 : vector<1x2x2xf32>
    %19 = math.exp %18 : vector<1x2x2xf32>
    %cst_11 = arith.constant dense<0.000000e+00> : vector<1x2xf32>
    %20 = vector.multi_reduction <add>, %19, %cst_11 [2] : vector<1x2x2xf32> to vector<1x2xf32>
    %21 = vector.shape_cast %20 : vector<1x2xf32> to vector<1x2x1xf32>
    %22 = tpu.reciprocal %21 {approx = true} : vector<1x2x1xf32> -> vector<1x2x1xf32>
    %23 = vector.broadcast %22 : vector<1x2x1xf32> to vector<1x2x2xf32>
    %24 = arith.mulf %19, %23 : vector<1x2x2xf32>
    %25 = arith.truncf %24 : vector<1x2x2xf32> to vector<1x2x2xbf16>
    %cst_12 = arith.constant dense<0.000000e+00> : vector<1x2xf32>
    %26 = vector.multi_reduction <add>, %24, %cst_12 [2] : vector<1x2x2xf32> to vector<1x2xf32>
    %27 = vector.shape_cast %26 : vector<1x2xf32> to vector<1x2x1xf32>
    %cst_13 = arith.constant 0.000000e+00 : f32
    %28 = vector.broadcast %cst_13 : f32 to vector<1x2x1xf32>
    %29 = arith.cmpf ogt, %27, %28 : vector<1x2x1xf32>
    %cst_14 = arith.constant 9.99999996E-13 : f32
    %30 = vector.broadcast %cst_14 : f32 to vector<1x2x1xf32>
    %31 = arith.maximumf %27, %30 : vector<1x2x1xf32>
    %32 = math.rsqrt %31 : vector<1x2x1xf32>
    %cst_15 = arith.constant 0.000000e+00 : f32
    %33 = vector.broadcast %cst_15 : f32 to vector<1x2x1xf32>
    %34 = arith.select %29, %32, %33 : vector<1x2x1xi1>, vector<1x2x1xf32>
    %c0_16 = arith.constant 0 : index
    %c0_17 = arith.constant 0 : index
    %c0_18 = arith.constant 0 : index
    %35 = vector.load %arg5[%c0_16, %c0_17, %c0_18] : memref<1x2x32xf32, #tpu.memory_space<vmem>>, vector<1x2x32xf32>
    %36 = vector.broadcast %34 : vector<1x2x1xf32> to vector<1x2x32xf32>
    %37 = arith.mulf %35, %36 : vector<1x2x32xf32>
    %38 = arith.truncf %37 : vector<1x2x32xf32> to vector<1x2x32xbf16>
    "tpu.trace_start"() <{level = 10 : i32, message = "gij,gjh->gih"}> : () -> ()
    %cst_19 = arith.constant dense<0.000000e+00> : vector<1x2x32xf32>
    %39 = tpu.matmul %25, %38, %cst_19 {dimension_numbers = #tpu.dot_dimension_numbers<[2], [1], [1], [2], [0, 0, 0, 1, 1, 2], [0], [0]>} : vector<1x2x2xbf16>, vector<1x2x32xbf16>, vector<1x2x32xf32> -> vector<1x2x32xf32>
    "tpu.trace_stop"() : () -> ()
    %40 = vector.broadcast %34 : vector<1x2x1xf32> to vector<1x2x32xf32>
    %41 = arith.mulf %40, %39 : vector<1x2x32xf32>
    %c0_20 = arith.constant 0 : index
    %c0_21 = arith.constant 0 : index
    %c0_22 = arith.constant 0 : index
    %42 = vector.load %arg6[%c0_20, %c0_21, %c0_22] : memref<1x1x32xf32, #tpu.memory_space<vmem>>, vector<1x1x32xf32>
    %43 = vector.broadcast %42 : vector<1x1x32xf32> to vector<1x2x32xf32>
    %44 = arith.addf %41, %43 : vector<1x2x32xf32>
    %cst_23 = arith.constant 0.000000e+00 : f32
    %45 = vector.broadcast %cst_23 : f32 to vector<1x2x32xf32>
    %46 = arith.maximumf %44, %45 : vector<1x2x32xf32>
    %c0_24 = arith.constant 0 : index
    %c0_25 = arith.constant 0 : index
    %c0_26 = arith.constant 0 : index
    %47 = vector.load %arg4[%c0_24, %c0_25, %c0_26] : memref<1x2x32xf32, #tpu.memory_space<vmem>>, vector<1x2x32xf32>
    %cst_27 = arith.constant dense<0xFF800000> : vector<1x32xf32>
    %48 = vector.multi_reduction <maximumf>, %47, %cst_27 [1] : vector<1x2x32xf32> to vector<1x32xf32>
    %49 = vector.shape_cast %48 : vector<1x32xf32> to vector<1x1x32xf32>
    %cst_28 = arith.constant 0.000000e+00 : f32
    %50 = vector.broadcast %cst_28 : f32 to vector<1x1x32xf32>
    %51 = arith.maximumf %49, %50 : vector<1x1x32xf32>
    %cst_29 = arith.constant dense<0xFF800000> : vector<1x32xf32>
    %52 = vector.multi_reduction <maximumf>, %46, %cst_29 [1] : vector<1x2x32xf32> to vector<1x32xf32>
    %53 = vector.shape_cast %52 : vector<1x32xf32> to vector<1x1x32xf32>
    %cst_30 = arith.constant 0.000000e+00 : f32
    %54 = vector.broadcast %cst_30 : f32 to vector<1x1x32xf32>
    %55 = arith.maximumf %53, %54 : vector<1x1x32xf32>
    %56 = arith.addf %51, %55 : vector<1x1x32xf32>
    %cst_31 = arith.constant dense<0.000000e+00> : vector<1x32xf32>
    %57 = vector.multi_reduction <add>, %47, %cst_31 [1] : vector<1x2x32xf32> to vector<1x32xf32>
    %58 = vector.shape_cast %57 : vector<1x32xf32> to vector<1x1x32xf32>
    %cst_32 = arith.constant 5.000000e-01 : f32
    %59 = vector.broadcast %cst_32 : f32 to vector<1x1x32xf32>
    %60 = arith.mulf %58, %59 : vector<1x1x32xf32>
    %cst_33 = arith.constant 0.000000e+00 : f32
    %61 = vector.broadcast %cst_33 : f32 to vector<1x1x32xf32>
    %62 = arith.maximumf %60, %61 : vector<1x1x32xf32>
    %cst_34 = arith.constant dense<0.000000e+00> : vector<1x32xf32>
    %63 = vector.multi_reduction <add>, %46, %cst_34 [1] : vector<1x2x32xf32> to vector<1x32xf32>
    %64 = vector.shape_cast %63 : vector<1x32xf32> to vector<1x1x32xf32>
    %cst_35 = arith.constant 5.000000e-01 : f32
    %65 = vector.broadcast %cst_35 : f32 to vector<1x1x32xf32>
    %66 = arith.mulf %64, %65 : vector<1x1x32xf32>
    %cst_36 = arith.constant 0.000000e+00 : f32
    %67 = vector.broadcast %cst_36 : f32 to vector<1x1x32xf32>
    %68 = arith.maximumf %66, %67 : vector<1x1x32xf32>
    %69 = arith.addf %62, %68 : vector<1x1x32xf32>
    %c0_37 = arith.constant 0 : index
    %c0_38 = arith.constant 0 : index
    %c0_39 = arith.constant 0 : index
    %70 = vector.load %arg7[%c0_37, %c0_38, %c0_39] : memref<1x1x64xf32, #tpu.memory_space<vmem>>, vector<1x1x32xf32>
    tpu.vector_store %arg7[%c0_37, %c0_38, %c0_39], %56 {strides = array<i32>} : memref<1x1x64xf32, #tpu.memory_space<vmem>>, vector<1x1x32xf32>,
    %c0_40 = arith.constant 0 : index
    %c0_41 = arith.constant 0 : index
    %c32 = arith.constant 32 : index
    %71 = vector.load %arg7[%c0_40, %c0_41, %c32] : memref<1x1x64xf32, #tpu.memory_space<vmem>>, vector<1x1x32xf32>
    tpu.vector_store %arg7[%c0_40, %c0_41, %c32], %69 {strides = array<i32>} : memref<1x1x64xf32, #tpu.memory_space<vmem>>, vector<1x1x32xf32>,
    return
  }
  func.func @transform_0(%arg0: i32) -> (i32, i32, i32) {
    %c0_i32 = arith.constant 0 : i32
    %c0_i32_0 = arith.constant 0 : i32
    %c0_i32_1 = arith.constant 0 : i32
    return %arg0, %c0_i32, %c0_i32_0 : i32, i32, i32
  }
  func.func @transform_1(%arg0: i32) -> (i32, i32, i32) {
    %c0_i32 = arith.constant 0 : i32
    %c0_i32_0 = arith.constant 0 : i32
    %c0_i32_1 = arith.constant 0 : i32
    return %arg0, %c0_i32, %c0_i32_0 : i32, i32, i32
  }
  func.func @transform_2(%arg0: i32) -> (i32, i32, i32) {
    %c0_i32 = arith.constant 0 : i32
    %c0_i32_0 = arith.constant 0 : i32
    %c0_i32_1 = arith.constant 0 : i32
    return %arg0, %c0_i32, %c0_i32_0 : i32, i32, i32
  }
  func.func @transform_3(%arg0: i32) -> (i32, i32, i32) {
    %c0_i32 = arith.constant 0 : i32
    %c0_i32_0 = arith.constant 0 : i32
    %c0_i32_1 = arith.constant 0 : i32
    return %arg0, %c0_i32, %c0_i32_0 : i32, i32, i32
  }
  func.func @transform_4(%arg0: i32) -> (i32, i32, i32) {
    %c0_i32 = arith.constant 0 : i32
    %c0_i32_0 = arith.constant 0 : i32
    %c0_i32_1 = arith.constant 0 : i32
    return %arg0, %c0_i32, %c0_i32_0 : i32, i32, i32
  }
  func.func @transform_5(%arg0: i32) -> (i32, i32, i32) {
    %c0_i32 = arith.constant 0 : i32
    %c0_i32_0 = arith.constant 0 : i32
    %c0_i32_1 = arith.constant 0 : i32
    %c0_i32_2 = arith.constant 0 : i32
    return %c0_i32, %c0_i32_0, %c0_i32_1 : i32, i32, i32
  }
  func.func @transform_6(%arg0: i32) -> (i32, i32, i32) {
    %c0_i32 = arith.constant 0 : i32
    %c0_i32_0 = arith.constant 0 : i32
    %c0_i32_1 = arith.constant 0 : i32
    return %arg0, %c0_i32, %c0_i32_0 : i32, i32, i32
  }
}

</mosaic_0001>

<llo_original>
// kernel: neg.0
$region0: #{neg.0}
  #allocation0 [shape = 's32[1]{0}', space=sflag, size = 0x4, scoped, tag = 'scoped memory for neg.0']
  %s0 = inlined_call_operand.vmem [shape: f32[2,8,1], index: 0, kind: input, shape index: {}]
  %s1 = inlined_call_operand.vmem [shape: f32[2,8,1], index: 1, kind: output, shape index: {}]
  %v2 = vld [vmem:[%s0] sm:$0xff]
  %3 = xla_tuple %v2
  %4 = xla_tuple %3
  %v5 = vxor.u32 %v2, 2147483648
  %6 = xla_tuple %v5
  %7 = vst [vmem:[%s1] sm:$0xff] %v5
  %s8 = scalar_lea.vmem %s0, 8
  %v9 = vld [vmem:[%s8] sm:$0xff]
  %10 = xla_tuple %v9
  %11 = xla_tuple %10
  %v12 = vxor.u32 %v9, 2147483648
  %13 = xla_tuple %v12
  %s14 = scalar_lea.vmem %s1, 8
  %15 = vst [vmem:[%s14] sm:$0xff] %v12

// kernel: neg.1
$region0: #{neg.1}
  #allocation0 [shape = 's32[1]{0}', space=sflag, size = 0x4, scoped, tag = 'scoped memory for neg.1']
  %s0 = inlined_call_operand.vmem [shape: f32[2,4,1], index: 0, kind: input, shape index: {}]
  %s1 = inlined_call_operand.vmem [shape: f32[2,4,1], index: 1, kind: output, shape index: {}]
  %v2 = vld [vmem:[%s0] sm:$0xf]
  %3 = xla_tuple %v2
  %4 = xla_tuple %3
  %v5 = vxor.u32 %v2, 2147483648
  %6 = xla_tuple %v5
  %7 = vst [vmem:[%s1] sm:$0xf] %v5
  %s8 = scalar_lea.vmem %s0, 4
  %v9 = vld [vmem:[%s8] sm:$0xf]
  %10 = xla_tuple %v9
  %11 = xla_tuple %10
  %v12 = vxor.u32 %v9, 2147483648
  %13 = xla_tuple %v12
  %s14 = scalar_lea.vmem %s1, 4
  %15 = vst [vmem:[%s14] sm:$0xf] %v12

// kernel: model_forward.4
$region0: #{model_forward.4}
  #allocation0 [shape = 'u32[]', space=smem, size = 0x4, offset = 0x4, fixed_abs, tag = 'smem constant byte address 0x4 - core index']
  #allocation1 [shape = 'u32[144,128]{1,0:T(1,128)}', space=vmem, size = 0x12000, scoped, tag = 'internal scratch']
  %s0 = inlined_call_operand.vmem [shape: bf16[2,8,8], index: 0, kind: input, shape index: {}]
  %s1 = inlined_call_operand.vmem [shape: f32[2,8,32], index: 1, kind: input, shape index: {}]
  %s2 = inlined_call_operand.vmem [shape: f32[1,1,32], index: 2, kind: input, shape index: {}]
  %s3 = inlined_call_operand.vmem [shape: f32[2,8,32], index: 3, kind: output, shape index: {0}]
  %s4 = inlined_call_operand.vmem [shape: f32[2,8,1], index: 4, kind: output, shape index: {1}]
  %5 = xla_tuple %s3, %s4
  %s6 = sld [smem:[#allocation0]]
  $region53: #{model_forward.4} parent=0
    _
  %s8 = ssub.s32 1, %s6
  %s9 = scalar_select 0, %s8, %s6
  loop: start=0, step=1, limit=4
  $region2: #{model_forward.4} parent=0 // loop_pre_header
    _
  $region3: #{model_forward.4} parent=0 // loop_header
    %s11 = sphi 0, %s15
    %p12 = scmp.ge.s32.totalorder %s11, 4
    %s21 = sphi 0, %s23
    %s24 = sphi 0, %s21
    %s25 = sphi 0, %s24
    %s41 = sphi 0, %s25
    %s47 = sphi 0, %s49
    %s50 = sphi 0, %s47
    %s51 = sphi 0, %s50
    %s67 = sphi 0, %s51
    %s71 = sphi 0, %s71
    %s73 = sphi 0, %s71
    %s74 = sphi 0, %s73
    %s88 = sphi 0, %s74
    %s94 = sphi 0, %s96
    %s97 = sphi 0, %s94
    %s98 = sphi 0, %s97
    %s114 = sphi 0, %s98
    %s120 = sphi 0, %s122
    %s123 = sphi 0, %s120
    %s124 = sphi 0, %s123
    %s140 = sphi 0, %s124
  $region4: #{model_forward.4} parent=0 // loop_header_branch
    %14 = sbr.rel (%p12) target = $region8
  $region5: #{model_forward.4} parent=0 // loop_body
    %s16 = ssub.s32 %s11, 1
    %s17 = ssub.s32 %s11, 2
    %s18 = sadd.s32 %s11, 1
    %s19 = ssub.s32 %s11, %s18
    %p20 = scmp.eq.s32.totalorder %s19, 0
    %s22 = sadd.s32 %s21, 1
    %s23 = scalar_select %p20, %s21, %s22
    %p26 = pneg %p20
    %p27 = scmp.eq.s32.totalorder %s11, 1
    %p28 = por %p26, %p27
    %p29 = scmp.ne.s32.totalorder %s21, %s24
    %p30 = scmp.eq.s32.totalorder %s11, 0
    %p31 = por %p29, %p30
    %p32 = scmp.ne.s32.totalorder %s21, %s24
    %p33 = scmp.eq.s32.totalorder %s16, 1
    %p34 = por %p32, %p33
    %p35 = scmp.ne.s32.totalorder %s24, %s25
    %p36 = scmp.eq.s32.totalorder %s16, 0
    %p37 = por %p35, %p36
    %p38 = scmp.ne.s32.totalorder %s24, %s25
    %p39 = scmp.eq.s32.totalorder %s17, 1
    %p40 = por %p38, %p39
    %p42 = scmp.ne.s32.totalorder %s25, %s41
    %p43 = scmp.eq.s32.totalorder %s17, 0
    %p44 = por %p42, %p43
    %s45 = ssub.s32 %s11, %s18
    %p46 = scmp.eq.s32.totalorder %s45, 0
    %s48 = sadd.s32 %s47, 1
    %s49 = scalar_select %p46, %s47, %s48
    %p52 = pneg %p46
    %p53 = scmp.eq.s32.totalorder %s11, 1
    %p54 = por %p52, %p53
    %p55 = scmp.ne.s32.totalorder %s47, %s50
    %p56 = scmp.eq.s32.totalorder %s11, 0
    %p57 = por %p55, %p56
    %p58 = scmp.ne.s32.totalorder %s47, %s50
    %p59 = scmp.eq.s32.totalorder %s16, 1
    %p60 = por %p58, %p59
    %p61 = scmp.ne.s32.totalorder %s50, %s51
    %p62 = scmp.eq.s32.totalorder %s16, 0
    %p63 = por %p61, %p62
    %p64 = scmp.ne.s32.totalorder %s50, %s51
    %p65 = scmp.eq.s32.totalorder %s17, 1
    %p66 = por %p64, %p65
    %p68 = scmp.ne.s32.totalorder %s51, %s67
    %p69 = scmp.eq.s32.totalorder %s17, 0
    %p70 = por %p68, %p69
    %s72 = sadd.s32 %s71, 1
    %p75 = scmp.eq.s32.totalorder %s11, 1
    %p76 = scmp.ne.s32.totalorder %s71, %s73
    %p77 = scmp.eq.s32.totalorder %s11, 0
    %p78 = por %p76, %p77
    %p79 = scmp.ne.s32.totalorder %s71, %s73
    %p80 = scmp.eq.s32.totalorder %s16, 1
    %p81 = por %p79, %p80
    %p82 = scmp.ne.s32.totalorder %s73, %s74
    %p83 = scmp.eq.s32.totalorder %s16, 0
    %p84 = por %p82, %p83
    %p85 = scmp.ne.s32.totalorder %s73, %s74
    %p86 = scmp.eq.s32.totalorder %s17, 1
    %p87 = por %p85, %p86
    %p89 = scmp.ne.s32.totalorder %s74, %s88
    %p90 = scmp.eq.s32.totalorder %s17, 0
    %p91 = por %p89, %p90
    %s92 = ssub.s32 %s11, %s18
    %p93 = scmp.eq.s32.totalorder %s92, 0
    %s95 = sadd.s32 %s94, 1
    %s96 = scalar_select %p93, %s94, %s95
    %p99 = pneg %p93
    %p100 = scmp.eq.s32.totalorder %s11, 1
    %p101 = por %p99, %p100
    %p102 = scmp.ne.s32.totalorder %s94, %s97
    %p103 = scmp.eq.s32.totalorder %s11, 0
    %p104 = por %p102, %p103
    %p105 = scmp.ne.s32.totalorder %s94, %s97
    %p106 = scmp.eq.s32.totalorder %s16, 1
    %p107 = por %p105, %p106
    %p108 = scmp.ne.s32.totalorder %s97, %s98
    %p109 = scmp.eq.s32.totalorder %s16, 0
    %p110 = por %p108, %p109
    %p111 = scmp.ne.s32.totalorder %s97, %s98
    %p112 = scmp.eq.s32.totalorder %s17, 1
    %p113 = por %p111, %p112
    %p115 = scmp.ne.s32.totalorder %s98, %s114
    %p116 = scmp.eq.s32.totalorder %s17, 0
    %p117 = por %p115, %p116
    %s118 = ssub.s32 %s11, %s18
    %p119 = scmp.eq.s32.totalorder %s118, 0
    %s121 = sadd.s32 %s120, 1
    %s122 = scalar_select %p119, %s120, %s121
    %p125 = pneg %p119
    %p126 = scmp.eq.s32.totalorder %s11, 1
    %p127 = por %p125, %p126
    %p128 = scmp.ne.s32.totalorder %s120, %s123
    %p129 = scmp.eq.s32.totalorder %s11, 0
    %p130 = por %p128, %p129
    %p131 = scmp.ne.s32.totalorder %s120, %s123
    %p132 = scmp.eq.s32.totalorder %s16, 1
    %p133 = por %p131, %p132
    %p134 = scmp.ne.s32.totalorder %s123, %s124
    %p135 = scmp.eq.s32.totalorder %s16, 0
    %p136 = por %p134, %p135
    %p137 = scmp.ne.s32.totalorder %s123, %s124
    %p138 = scmp.eq.s32.totalorder %s17, 1
    %p139 = por %p137, %p138
    %p141 = scmp.ne.s32.totalorder %s124, %s140
    %p142 = scmp.eq.s32.totalorder %s17, 0
    %p143 = por %p141, %p142
    %p144 = scmp.le.s32.totalorder 1, %s11
    %p145 = scmp.lt.s32.totalorder %s11, 3
    %p146 = pnand %p144, %p145
    %p147 = pneg %p146
    // Predicated region
    $region9: #{model_forward.4} parent=5 // pred_check
      _
    $region10: #{model_forward.4} parent=5 // pred_check_branch
      %149 = sbr.rel (%p146) target = $region12
    $region11: #{model_forward.4} parent=5 // pred_region
      %s150 = ssub.s32 %s11, 1
      // Predicated region
      $region13: #{model_forward.4} parent=11 // pred_check
        %p151 = pneg %p84
      $region14: #{model_forward.4} parent=11 // pred_check_branch
        %153 = sbr.rel (%p151) target = $region16
      $region15: #{model_forward.4} parent=11 // pred_region
        _
      $region16: #{model_forward.4} parent=11 // pred_fallthru
        _
    $region12: #{model_forward.4} parent=5 // pred_fallthru
      _
    %p154 = scmp.lt.s32.totalorder %s11, 2
    // Predicated region
    $region17: #{model_forward.4} parent=5 // pred_check
      %p155 = pneg %p154
    $region18: #{model_forward.4} parent=5 // pred_check_branch
      %157 = sbr.rel (%p155) target = $region20
    $region19: #{model_forward.4} parent=5 // pred_region
      // Predicated region
      $region21: #{model_forward.4} parent=19 // pred_check
        %p158 = pneg %p31
      $region22: #{model_forward.4} parent=19 // pred_check_branch
        %160 = sbr.rel (%p158) target = $region24
      $region23: #{model_forward.4} parent=19 // pred_region
        %p161 = scmp.lt.s32.totalorder %s11, 1
        %s162 = scalar_select %p161, %s11, 1
        %s163 = smul.addr %s162, 4
        %s164 = scalar_lea.vmem %s0, %s163
      $region24: #{model_forward.4} parent=19 // pred_fallthru
        _
      // Predicated region
      $region25: #{model_forward.4} parent=19 // pred_check
        %p165 = pneg %p57
      $region26: #{model_forward.4} parent=19 // pred_check_branch
        %167 = sbr.rel (%p165) target = $region28
      $region27: #{model_forward.4} parent=19 // pred_region
        %p168 = scmp.lt.s32.totalorder %s11, 1
        %s169 = scalar_select %p168, %s11, 1
        %s170 = smul.addr %s169, 8
        %s171 = scalar_lea.vmem %s1, %s170
      $region28: #{model_forward.4} parent=19 // pred_fallthru
        _
    $region20: #{model_forward.4} parent=5 // pred_fallthru
      _
    %p172 = scmp.le.s32.totalorder 1, %s11
    %p173 = scmp.lt.s32.totalorder %s11, 3
    %p174 = pnand %p172, %p173
    %p175 = pneg %p174
    // Predicated region
    $region29: #{model_forward.4} parent=5 // pred_check
      _
    $region30: #{model_forward.4} parent=5 // pred_check_branch
      %177 = sbr.rel (%p174) target = $region32
    $region31: #{model_forward.4} parent=5 // pred_region
      %s178 = ssub.s32 %s11, 1
      %p179 = scmp.lt.s32.totalorder %s16, 1
      %s180 = scalar_select %p179, %s16, 1
      %s181 = smul.addr %s180, 4
      %s182 = scalar_lea.vmem %s0, %s181
      %p183 = pneg %p37
      %p184 = pneg %p34
      %p185 = scmp.lt.s32.totalorder %s16, 1
      %s186 = scalar_select %p185, %s16, 1
      %s187 = smul.addr %s186, 8
      %s188 = scalar_lea.vmem %s1, %s187
      %p189 = pneg %p63
      %p190 = pneg %p60
      %p191 = pneg %p84
      %p192 = pneg %p81
      %p193 = pneg %p110
      %p194 = pneg %p107
      %p195 = scmp.lt.s32.totalorder %s16, 1
      %s196 = scalar_select %p195, %s16, 1
      %s197 = smul.addr %s196, 8
      %s198 = scalar_lea.vmem %s3, %s197
      %p199 = pneg %p136
      %p200 = pneg %p133
      %p201 = scmp.lt.s32.totalorder %s16, 1
      %s202 = scalar_select %p201, %s16, 1
      %s203 = smul.addr %s202, 8
      %s204 = scalar_lea.vmem %s4, %s203
      %p205 = scmp.lt.s32.totalorder %s16, 1
      %s206 = scalar_select %p205, %s16, 1
      %s207 = smul.addr %s206, 4
      %s208 = scalar_lea.vmem %s0, %s207
      %p209 = scmp.lt.s32.totalorder %s16, 1
      %s210 = scalar_select %p209, %s16, 1
      %s211 = smul.addr %s210, 8
      %s212 = scalar_lea.vmem %s1, %s211
      %p213 = scmp.lt.s32.totalorder %s16, 1
      %s214 = scalar_select %p213, %s16, 1
      %s215 = smul.addr %s214, 8
      %s216 = scalar_lea.vmem %s3, %s215
      %p217 = scmp.lt.s32.totalorder %s16, 1
      %s218 = scalar_select %p217, %s16, 1
      %s219 = smul.addr %s218, 8
      %s220 = scalar_lea.vmem %s4, %s219
      %v222 = vld [vmem:[%s208] sm:$0xf]
      %v223 = vunpack.c.l.bf16 %v222
      %v224 = vlaneseq
      %v225 = vshrl.u32 %v224, 7
      %v226 = vlaneseq
      %v227 = vand.u32 %v226, 127
      %vm228 = vcmp.eq.s32.totalorder %v225, %v227
      %vm229 = vcmask 64512
      %v230 = vsel %vm229, %v223, 0.0
      %231 = vadd.xlane.f32.xlu0 %v230
      %v232 = vpop.xlane.xlu0 %231
      %v233 = vsel %vm228, %v223, 0.0
      %v234 = vsel %vm229, %v233, 0.0
      %235 = vadd.xlane.f32.xlu0 %v234
      %v236 = vpop.xlane.xlu0 %235
      %vm237 = vcmp.eq.f32.partialorder %v236, 0.0
      %v238 = vsel %vm237, 1.0, 0.0
      %v239 = vadd.f32 %v232, %v238
      %vm240 = vcmp.gt.f32.partialorder %v239, 0.0
      %v241 = vmax.f32 %v239, 1e-12
      %v242 = vrsqrt.pop %v241
      %v243 = vsel %vm240, %v242, 0.0
      %vm244 = vcmp.gt.f32.partialorder %v232, 0.0
      %v245 = vmax.f32 %v232, 1e-12
      %v246 = vrsqrt.pop %v245
      %v247 = vsel %vm244, %v246, 0.0
      %v248 = vld [vmem:[%s212] sm:$0xff]
      %v249 = vmul.f32 %v248, %v243
      %v250 = vpack.c.bf16 %v249, %v249
      %v252 = vsel %vm229, %v222, 0
      %vm254 = vcmask 1043456
      %v256 = vsel %vm254, %v250, 0
      %258 = vmatprep.subr.bf16.mxu0 0
      %259 = vmatpush1.bf16.msra.mxu0 %v256
      %260 = vmatprep.subr.bf16.mxu0 0
      %261 = vmatpush1.bf16.msra.mxu0 0
      %262 = vmatprep.subr.bf16.mxu0 0
      %263 = vmatpush1.bf16.msra.mxu0 0
      %264 = vmatprep.subr.bf16.mxu0 0
      %265 = vmatpush1.bf16.msra.mxu0 0
      %266 = vmatprep.subr.bf16.mxu0 0
      %267 = vmatpush1.bf16.msra.mxu0 0
      %268 = vmatprep.subr.bf16.mxu0 0
      %269 = vmatpush1.bf16.msra.mxu0 0
      %270 = vmatprep.subr.bf16.mxu0 0
      %271 = vmatpush1.bf16.msra.mxu0 0
      %272 = vmatprep.subr.bf16.mxu0 0
      %273 = vmatpush1.bf16.msra.mxu0 0
      %274 = vmatprep.subr.bf16.mxu0 0
      %275 = vmatpush1.bf16.msra.mxu0 0
      %276 = vmatprep.subr.bf16.mxu0 0
      %277 = vmatpush1.bf16.msra.mxu0 0
      %278 = vmatprep.subr.bf16.mxu0 0
      %279 = vmatpush1.bf16.msra.mxu0 0
      %280 = vmatprep.subr.bf16.mxu0 0
      %281 = vmatpush1.bf16.msra.mxu0 0
      %282 = vmatprep.subr.bf16.mxu0 0
      %283 = vmatpush1.bf16.msra.mxu0 0
      %284 = vmatprep.subr.bf16.mxu0 0
      %285 = vmatpush1.bf16.msra.mxu0 0
      %286 = vmatprep.subr.bf16.mxu0 0
      %287 = vmatpush1.bf16.msra.mxu0 0
      %288 = vmatprep.subr.bf16.mxu0 0
      %289 = vmatpush1.bf16.msra.mxu0 0
      %290 = vmatprep.mubr.bf16.mxu0 0
      %291 = vmatmul.mubr.bf16.gmra.mrb[0].mxu0 %v252
      %v292 = vpop.f32.mrb[0].mxu0
      %v293 = vadd.f32 0.0, %v292
      %v294 = vpop.f32.mrb[0].mxu0
      %v295 = vpop.f32.mrb[0].mxu0
      %v296 = vpop.f32.mrb[0].mxu0
      %297 = vdwg.mxu0
      %v298 = vmul.f32 %v243, %v293
      %v299 = vmul.f32 %v238, %v243
      %v300 = vmul.f32 %v299, %v243
      %v301 = vmul.f32 %v300, %v248
      %v302 = vadd.f32 %v298, %v301
      %v303 = vld [vmem:[%s2] sm:$0x1]
      %v305 = vlaneseq
      %v306 = vshrl.u32 %v305, 7
      %v307 = vsub.s32 0, %v306
      %v308 = vrot.slane %v303, %v307
      %v310 = vadd.f32 %v302, %v308
      %v311 = vmax.f32 %v310, 0.0
      %vm312 = vcmask 261120
      %313 = vst.msk [vmem:[%s216] sm:$0xff] %vm312, %v311
      %v314 = vmul.f32 %v311, %v247
      %v315 = vpack.c.bf16 %v314, %v314
      %v317 = vsel %vm254, %v315, 0
      %319 = vmatprep.subr.bf16.mxu0 0
      %320 = vmatpush1.bf16.msra.mxu0 %v317
      %321 = vmatprep.subr.bf16.mxu0 0
      %322 = vmatpush1.bf16.msra.mxu0 0
      %323 = vmatprep.subr.bf16.mxu0 0
      %324 = vmatpush1.bf16.msra.mxu0 0
      %325 = vmatprep.subr.bf16.mxu0 0
      %326 = vmatpush1.bf16.msra.mxu0 0
      %327 = vmatprep.subr.bf16.mxu0 0
      %328 = vmatpush1.bf16.msra.mxu0 0
      %329 = vmatprep.subr.bf16.mxu0 0
      %330 = vmatpush1.bf16.msra.mxu0 0
      %331 = vmatprep.subr.bf16.mxu0 0
      %332 = vmatpush1.bf16.msra.mxu0 0
      %333 = vmatprep.subr.bf16.mxu0 0
      %334 = vmatpush1.bf16.msra.mxu0 0
      %335 = vmatprep.subr.bf16.mxu0 0
      %336 = vmatpush1.bf16.msra.mxu0 0
      %337 = vmatprep.subr.bf16.mxu0 0
      %338 = vmatpush1.bf16.msra.mxu0 0
      %339 = vmatprep.subr.bf16.mxu0 0
      %340 = vmatpush1.bf16.msra.mxu0 0
      %341 = vmatprep.subr.bf16.mxu0 0
      %342 = vmatpush1.bf16.msra.mxu0 0
      %343 = vmatprep.subr.bf16.mxu0 0
      %344 = vmatpush1.bf16.msra.mxu0 0
      %345 = vmatprep.subr.bf16.mxu0 0
      %346 = vmatpush1.bf16.msra.mxu0 0
      %347 = vmatprep.subr.bf16.mxu0 0
      %348 = vmatpush1.bf16.msra.mxu0 0
      %349 = vmatprep.subr.bf16.mxu0 0
      %350 = vmatpush1.bf16.msra.mxu0 0
      %351 = vmatprep.mubr.bf16.mxu0 0
      %352 = vmatmul.mubr.bf16.gmra.mrb[0].mxu0 %v252
      %v353 = vpop.f32.mrb[0].mxu0
      %v354 = vadd.f32 0.0, %v353
      %v355 = vpop.f32.mrb[0].mxu0
      %v356 = vpop.f32.mrb[0].mxu0
      %v357 = vpop.f32.mrb[0].mxu0
      %358 = vdwg.mxu0
      %v359 = vmul.f32 %v247, %v354
      %v360 = vsub.f32 %v311, %v359
      %v361 = vand.u32 2147483647, %v360
      %v362 = vsel %vm312, %v361, 0.0
      %363 = vadd.xlane.f32.xlu0 %v362
      %v364 = vpop.xlane.xlu0 %363
      %vm365 = vcmask 7168
      %366 = vst.msk [vmem:[%s220] sm:$0xff] %vm365, %v364
      %p367 = scmp.lt.s32.totalorder %s16, 1
      %s368 = scalar_select %p367, %s16, 1
      %s369 = smul.addr %s368, 8
      %s370 = scalar_lea.vmem %s3, %s369
      %p371 = scmp.lt.s32.totalorder %s16, 1
      %s372 = scalar_select %p371, %s16, 1
      %s373 = smul.addr %s372, 8
      %s374 = scalar_lea.vmem %s4, %s373
      // Predicated region
      $region33: #{model_forward.4} parent=31 // pred_check
        %p375 = pneg %p107
      $region34: #{model_forward.4} parent=31 // pred_check_branch
        %377 = sbr.rel (%p375) target = $region36
      $region35: #{model_forward.4} parent=31 // pred_region
        _
      $region36: #{model_forward.4} parent=31 // pred_fallthru
        _
      // Predicated region
      $region37: #{model_forward.4} parent=31 // pred_check
        %p378 = pneg %p133
      $region38: #{model_forward.4} parent=31 // pred_check_branch
        %380 = sbr.rel (%p378) target = $region40
      $region39: #{model_forward.4} parent=31 // pred_region
        _
      $region40: #{model_forward.4} parent=31 // pred_fallthru
        _
    $region32: #{model_forward.4} parent=5 // pred_fallthru
      _
    %p381 = scmp.le.s32.totalorder 2, %s11
    // Predicated region
    $region41: #{model_forward.4} parent=5 // pred_check
      %p382 = pneg %p381
    $region42: #{model_forward.4} parent=5 // pred_check_branch
      %384 = sbr.rel (%p382) target = $region44
    $region43: #{model_forward.4} parent=5 // pred_region
      %s385 = ssub.s32 %s11, 2
      // Predicated region
      $region45: #{model_forward.4} parent=43 // pred_check
        %p386 = pneg %p113
      $region46: #{model_forward.4} parent=43 // pred_check_branch
        %388 = sbr.rel (%p386) target = $region48
      $region47: #{model_forward.4} parent=43 // pred_region
        %p389 = scmp.lt.s32.totalorder %s17, 1
        %s390 = scalar_select %p389, %s17, 1
        %s391 = smul.addr %s390, 8
        %s392 = scalar_lea.vmem %s3, %s391
      $region48: #{model_forward.4} parent=43 // pred_fallthru
        _
      // Predicated region
      $region49: #{model_forward.4} parent=43 // pred_check
        %p393 = pneg %p139
      $region50: #{model_forward.4} parent=43 // pred_check_branch
        %395 = sbr.rel (%p393) target = $region52
      $region51: #{model_forward.4} parent=43 // pred_region
        %p396 = scmp.lt.s32.totalorder %s17, 1
        %s397 = scalar_select %p396, %s17, 1
        %s398 = smul.addr %s397, 8
        %s399 = scalar_lea.vmem %s4, %s398
      $region52: #{model_forward.4} parent=43 // pred_fallthru
        _
    $region44: #{model_forward.4} parent=5 // pred_fallthru
      _
  $region6: #{model_forward.4} parent=0 // loop_footer
    %s15 = sadd.s32 1, %s11
  $region7: #{model_forward.4} parent=0 // loop_footer_branch
    %10 = sbr.rel target = $region3
  $region8: #{model_forward.4} parent=0 // loop_exit
    _

// kernel: model_forward.5
$region0: #{model_forward.5}
  #allocation0 [shape = 'u32[]', space=smem, size = 0x4, offset = 0x4, fixed_abs, tag = 'smem constant byte address 0x4 - core index']
  #allocation1 [shape = 'u32[144,128]{1,0:T(1,128)}', space=vmem, size = 0x12000, scoped, tag = 'internal scratch']
  %s0 = inlined_call_operand.vmem [shape: bf16[2,4,4], index: 0, kind: input, shape index: {}]
  %s1 = inlined_call_operand.vmem [shape: f32[2,4,1], index: 1, kind: input, shape index: {}]
  %s2 = inlined_call_operand.vmem [shape: f32[2,1,4], index: 2, kind: input, shape index: {}]
  %s3 = inlined_call_operand.vmem [shape: f32[2,4,32], index: 3, kind: input, shape index: {}]
  %s4 = inlined_call_operand.vmem [shape: f32[2,4,32], index: 4, kind: input, shape index: {}]
  %s5 = inlined_call_operand.vmem [shape: f32[1,1,32], index: 5, kind: input, shape index: {}]
  %s6 = inlined_call_operand.vmem [shape: bf16[2,4,4], index: 6, kind: output, shape index: {0}]
  %s7 = inlined_call_operand.vmem [shape: f32[2,4,32], index: 7, kind: output, shape index: {1}]
  %s8 = inlined_call_operand.vmem [shape: f32[2,4,1], index: 8, kind: output, shape index: {2}]
  %s9 = inlined_call_operand.vmem [shape: f32[2,1,64], index: 9, kind: output, shape index: {3}]
  %10 = xla_tuple %s6, %s7, %s8, %s9
  %s11 = sld [smem:[#allocation0]]
  $region81: #{model_forward.5} parent=0
    _
  %s13 = ssub.s32 1, %s11
  %s14 = scalar_select 0, %s13, %s11
  loop: start=0, step=1, limit=4
  $region2: #{model_forward.5} parent=0 // loop_pre_header
    _
  $region3: #{model_forward.5} parent=0 // loop_header
    %s16 = sphi 0, %s20
    %p17 = scmp.ge.s32.totalorder %s16, 4
    %s26 = sphi 0, %s28
    %s29 = sphi 0, %s26
    %s30 = sphi 0, %s29
    %s46 = sphi 0, %s30
    %s52 = sphi 0, %s54
    %s55 = sphi 0, %s52
    %s56 = sphi 0, %s55
    %s72 = sphi 0, %s56
    %s78 = sphi 0, %s80
    %s81 = sphi 0, %s78
    %s82 = sphi 0, %s81
    %s98 = sphi 0, %s82
    %s104 = sphi 0, %s106
    %s107 = sphi 0, %s104
    %s108 = sphi 0, %s107
    %s124 = sphi 0, %s108
    %s130 = sphi 0, %s132
    %s133 = sphi 0, %s130
    %s134 = sphi 0, %s133
    %s150 = sphi 0, %s134
    %s154 = sphi 0, %s154
    %s156 = sphi 0, %s154
    %s157 = sphi 0, %s156
    %s171 = sphi 0, %s157
    %s177 = sphi 0, %s179
    %s180 = sphi 0, %s177
    %s181 = sphi 0, %s180
    %s197 = sphi 0, %s181
    %s203 = sphi 0, %s205
    %s206 = sphi 0, %s203
    %s207 = sphi 0, %s206
    %s223 = sphi 0, %s207
    %s229 = sphi 0, %s231
    %s232 = sphi 0, %s229
    %s233 = sphi 0, %s232
    %s249 = sphi 0, %s233
    %s255 = sphi 0, %s257
    %s258 = sphi 0, %s255
    %s259 = sphi 0, %s258
    %s275 = sphi 0, %s259
  $region4: #{model_forward.5} parent=0 // loop_header_branch
    %19 = sbr.rel (%p17) target = $region8
  $region5: #{model_forward.5} parent=0 // loop_body
    %s21 = ssub.s32 %s16, 1
    %s22 = ssub.s32 %s16, 2
    %s23 = sadd.s32 %s16, 1
    %s24 = ssub.s32 %s16, %s23
    %p25 = scmp.eq.s32.totalorder %s24, 0
    %s27 = sadd.s32 %s26, 1
    %s28 = scalar_select %p25, %s26, %s27
    %p31 = pneg %p25
    %p32 = scmp.eq.s32.totalorder %s16, 1
    %p33 = por %p31, %p32
    %p34 = scmp.ne.s32.totalorder %s26, %s29
    %p35 = scmp.eq.s32.totalorder %s16, 0
    %p36 = por %p34, %p35
    %p37 = scmp.ne.s32.totalorder %s26, %s29
    %p38 = scmp.eq.s32.totalorder %s21, 1
    %p39 = por %p37, %p38
    %p40 = scmp.ne.s32.totalorder %s29, %s30
    %p41 = scmp.eq.s32.totalorder %s21, 0
    %p42 = por %p40, %p41
    %p43 = scmp.ne.s32.totalorder %s29, %s30
    %p44 = scmp.eq.s32.totalorder %s22, 1
    %p45 = por %p43, %p44
    %p47 = scmp.ne.s32.totalorder %s30, %s46
    %p48 = scmp.eq.s32.totalorder %s22, 0
    %p49 = por %p47, %p48
    %s50 = ssub.s32 %s16, %s23
    %p51 = scmp.eq.s32.totalorder %s50, 0
    %s53 = sadd.s32 %s52, 1
    %s54 = scalar_select %p51, %s52, %s53
    %p57 = pneg %p51
    %p58 = scmp.eq.s32.totalorder %s16, 1
    %p59 = por %p57, %p58
    %p60 = scmp.ne.s32.totalorder %s52, %s55
    %p61 = scmp.eq.s32.totalorder %s16, 0
    %p62 = por %p60, %p61
    %p63 = scmp.ne.s32.totalorder %s52, %s55
    %p64 = scmp.eq.s32.totalorder %s21, 1
    %p65 = por %p63, %p64
    %p66 = scmp.ne.s32.totalorder %s55, %s56
    %p67 = scmp.eq.s32.totalorder %s21, 0
    %p68 = por %p66, %p67
    %p69 = scmp.ne.s32.totalorder %s55, %s56
    %p70 = scmp.eq.s32.totalorder %s22, 1
    %p71 = por %p69, %p70
    %p73 = scmp.ne.s32.totalorder %s56, %s72
    %p74 = scmp.eq.s32.totalorder %s22, 0
    %p75 = por %p73, %p74
    %s76 = ssub.s32 %s16, %s23
    %p77 = scmp.eq.s32.totalorder %s76, 0
    %s79 = sadd.s32 %s78, 1
    %s80 = scalar_select %p77, %s78, %s79
    %p83 = pneg %p77
    %p84 = scmp.eq.s32.totalorder %s16, 1
    %p85 = por %p83, %p84
    %p86 = scmp.ne.s32.totalorder %s78, %s81
    %p87 = scmp.eq.s32.totalorder %s16, 0
    %p88 = por %p86, %p87
    %p89 = scmp.ne.s32.totalorder %s78, %s81
    %p90 = scmp.eq.s32.totalorder %s21, 1
    %p91 = por %p89, %p90
    %p92 = scmp.ne.s32.totalorder %s81, %s82
    %p93 = scmp.eq.s32.totalorder %s21, 0
    %p94 = por %p92, %p93
    %p95 = scmp.ne.s32.totalorder %s81, %s82
    %p96 = scmp.eq.s32.totalorder %s22, 1
    %p97 = por %p95, %p96
    %p99 = scmp.ne.s32.totalorder %s82, %s98
    %p100 = scmp.eq.s32.totalorder %s22, 0
    %p101 = por %p99, %p100
    %s102 = ssub.s32 %s16, %s23
    %p103 = scmp.eq.s32.totalorder %s102, 0
    %s105 = sadd.s32 %s104, 1
    %s106 = scalar_select %p103, %s104, %s105
    %p109 = pneg %p103
    %p110 = scmp.eq.s32.totalorder %s16, 1
    %p111 = por %p109, %p110
    %p112 = scmp.ne.s32.totalorder %s104, %s107
    %p113 = scmp.eq.s32.totalorder %s16, 0
    %p114 = por %p112, %p113
    %p115 = scmp.ne.s32.totalorder %s104, %s107
    %p116 = scmp.eq.s32.totalorder %s21, 1
    %p117 = por %p115, %p116
    %p118 = scmp.ne.s32.totalorder %s107, %s108
    %p119 = scmp.eq.s32.totalorder %s21, 0
    %p120 = por %p118, %p119
    %p121 = scmp.ne.s32.totalorder %s107, %s108
    %p122 = scmp.eq.s32.totalorder %s22, 1
    %p123 = por %p121, %p122
    %p125 = scmp.ne.s32.totalorder %s108, %s124
    %p126 = scmp.eq.s32.totalorder %s22, 0
    %p127 = por %p125, %p126
    %s128 = ssub.s32 %s16, %s23
    %p129 = scmp.eq.s32.totalorder %s128, 0
    %s131 = sadd.s32 %s130, 1
    %s132 = scalar_select %p129, %s130, %s131
    %p135 = pneg %p129
    %p136 = scmp.eq.s32.totalorder %s16, 1
    %p137 = por %p135, %p136
    %p138 = scmp.ne.s32.totalorder %s130, %s133
    %p139 = scmp.eq.s32.totalorder %s16, 0
    %p140 = por %p138, %p139
    %p141 = scmp.ne.s32.totalorder %s130, %s133
    %p142 = scmp.eq.s32.totalorder %s21, 1
    %p143 = por %p141, %p142
    %p144 = scmp.ne.s32.totalorder %s133, %s134
    %p145 = scmp.eq.s32.totalorder %s21, 0
    %p146 = por %p144, %p145
    %p147 = scmp.ne.s32.totalorder %s133, %s134
    %p148 = scmp.eq.s32.totalorder %s22, 1
    %p149 = por %p147, %p148
    %p151 = scmp.ne.s32.totalorder %s134, %s150
    %p152 = scmp.eq.s32.totalorder %s22, 0
    %p153 = por %p151, %p152
    %s155 = sadd.s32 %s154, 1
    %p158 = scmp.eq.s32.totalorder %s16, 1
    %p159 = scmp.ne.s32.totalorder %s154, %s156
    %p160 = scmp.eq.s32.totalorder %s16, 0
    %p161 = por %p159, %p160
    %p162 = scmp.ne.s32.totalorder %s154, %s156
    %p163 = scmp.eq.s32.totalorder %s21, 1
    %p164 = por %p162, %p163
    %p165 = scmp.ne.s32.totalorder %s156, %s157
    %p166 = scmp.eq.s32.totalorder %s21, 0
    %p167 = por %p165, %p166
    %p168 = scmp.ne.s32.totalorder %s156, %s157
    %p169 = scmp.eq.s32.totalorder %s22, 1
    %p170 = por %p168, %p169
    %p172 = scmp.ne.s32.totalorder %s157, %s171
    %p173 = scmp.eq.s32.totalorder %s22, 0
    %p174 = por %p172, %p173
    %s175 = ssub.s32 %s16, %s23
    %p176 = scmp.eq.s32.totalorder %s175, 0
    %s178 = sadd.s32 %s177, 1
    %s179 = scalar_select %p176, %s177, %s178
    %p182 = pneg %p176
    %p183 = scmp.eq.s32.totalorder %s16, 1
    %p184 = por %p182, %p183
    %p185 = scmp.ne.s32.totalorder %s177, %s180
    %p186 = scmp.eq.s32.totalorder %s16, 0
    %p187 = por %p185, %p186
    %p188 = scmp.ne.s32.totalorder %s177, %s180
    %p189 = scmp.eq.s32.totalorder %s21, 1
    %p190 = por %p188, %p189
    %p191 = scmp.ne.s32.totalorder %s180, %s181
    %p192 = scmp.eq.s32.totalorder %s21, 0
    %p193 = por %p191, %p192
    %p194 = scmp.ne.s32.totalorder %s180, %s181
    %p195 = scmp.eq.s32.totalorder %s22, 1
    %p196 = por %p194, %p195
    %p198 = scmp.ne.s32.totalorder %s181, %s197
    %p199 = scmp.eq.s32.totalorder %s22, 0
    %p200 = por %p198, %p199
    %s201 = ssub.s32 %s16, %s23
    %p202 = scmp.eq.s32.totalorder %s201, 0
    %s204 = sadd.s32 %s203, 1
    %s205 = scalar_select %p202, %s203, %s204
    %p208 = pneg %p202
    %p209 = scmp.eq.s32.totalorder %s16, 1
    %p210 = por %p208, %p209
    %p211 = scmp.ne.s32.totalorder %s203, %s206
    %p212 = scmp.eq.s32.totalorder %s16, 0
    %p213 = por %p211, %p212
    %p214 = scmp.ne.s32.totalorder %s203, %s206
    %p215 = scmp.eq.s32.totalorder %s21, 1
    %p216 = por %p214, %p215
    %p217 = scmp.ne.s32.totalorder %s206, %s207
    %p218 = scmp.eq.s32.totalorder %s21, 0
    %p219 = por %p217, %p218
    %p220 = scmp.ne.s32.totalorder %s206, %s207
    %p221 = scmp.eq.s32.totalorder %s22, 1
    %p222 = por %p220, %p221
    %p224 = scmp.ne.s32.totalorder %s207, %s223
    %p225 = scmp.eq.s32.totalorder %s22, 0
    %p226 = por %p224, %p225
    %s227 = ssub.s32 %s16, %s23
    %p228 = scmp.eq.s32.totalorder %s227, 0
    %s230 = sadd.s32 %s229, 1
    %s231 = scalar_select %p228, %s229, %s230
    %p234 = pneg %p228
    %p235 = scmp.eq.s32.totalorder %s16, 1
    %p236 = por %p234, %p235
    %p237 = scmp.ne.s32.totalorder %s229, %s232
    %p238 = scmp.eq.s32.totalorder %s16, 0
    %p239 = por %p237, %p238
    %p240 = scmp.ne.s32.totalorder %s229, %s232
    %p241 = scmp.eq.s32.totalorder %s21, 1
    %p242 = por %p240, %p241
    %p243 = scmp.ne.s32.totalorder %s232, %s233
    %p244 = scmp.eq.s32.totalorder %s21, 0
    %p245 = por %p243, %p244
    %p246 = scmp.ne.s32.totalorder %s232, %s233
    %p247 = scmp.eq.s32.totalorder %s22, 1
    %p248 = por %p246, %p247
    %p250 = scmp.ne.s32.totalorder %s233, %s249
    %p251 = scmp.eq.s32.totalorder %s22, 0
    %p252 = por %p250, %p251
    %s253 = ssub.s32 %s16, %s23
    %p254 = scmp.eq.s32.totalorder %s253, 0
    %s256 = sadd.s32 %s255, 1
    %s257 = scalar_select %p254, %s255, %s256
    %p260 = pneg %p254
    %p261 = scmp.eq.s32.totalorder %s16, 1
    %p262 = por %p260, %p261
    %p263 = scmp.ne.s32.totalorder %s255, %s258
    %p264 = scmp.eq.s32.totalorder %s16, 0
    %p265 = por %p263, %p264
    %p266 = scmp.ne.s32.totalorder %s255, %s258
    %p267 = scmp.eq.s32.totalorder %s21, 1
    %p268 = por %p266, %p267
    %p269 = scmp.ne.s32.totalorder %s258, %s259
    %p270 = scmp.eq.s32.totalorder %s21, 0
    %p271 = por %p269, %p270
    %p272 = scmp.ne.s32.totalorder %s258, %s259
    %p273 = scmp.eq.s32.totalorder %s22, 1
    %p274 = por %p272, %p273
    %p276 = scmp.ne.s32.totalorder %s259, %s275
    %p277 = scmp.eq.s32.totalorder %s22, 0
    %p278 = por %p276, %p277
    %p279 = scmp.le.s32.totalorder 1, %s16
    %p280 = scmp.lt.s32.totalorder %s16, 3
    %p281 = pnand %p279, %p280
    %p282 = pneg %p281
    // Predicated region
    $region9: #{model_forward.5} parent=5 // pred_check
      _
    $region10: #{model_forward.5} parent=5 // pred_check_branch
      %284 = sbr.rel (%p281) target = $region12
    $region11: #{model_forward.5} parent=5 // pred_region
      %s285 = ssub.s32 %s16, 1
      // Predicated region
      $region13: #{model_forward.5} parent=11 // pred_check
        %p286 = pneg %p167
      $region14: #{model_forward.5} parent=11 // pred_check_branch
        %288 = sbr.rel (%p286) target = $region16
      $region15: #{model_forward.5} parent=11 // pred_region
        _
      $region16: #{model_forward.5} parent=11 // pred_fallthru
        _
    $region12: #{model_forward.5} parent=5 // pred_fallthru
      _
    %p289 = scmp.lt.s32.totalorder %s16, 2
    // Predicated region
    $region17: #{model_forward.5} parent=5 // pred_check
      %p290 = pneg %p289
    $region18: #{model_forward.5} parent=5 // pred_check_branch
      %292 = sbr.rel (%p290) target = $region20
    $region19: #{model_forward.5} parent=5 // pred_region
      // Predicated region
      $region21: #{model_forward.5} parent=19 // pred_check
        %p293 = pneg %p36
      $region22: #{model_forward.5} parent=19 // pred_check_branch
        %295 = sbr.rel (%p293) target = $region24
      $region23: #{model_forward.5} parent=19 // pred_region
        %p296 = scmp.lt.s32.totalorder %s16, 1
        %s297 = scalar_select %p296, %s16, 1
        %s298 = smul.addr %s297, 2
        %s299 = scalar_lea.vmem %s0, %s298
      $region24: #{model_forward.5} parent=19 // pred_fallthru
        _
      // Predicated region
      $region25: #{model_forward.5} parent=19 // pred_check
        %p300 = pneg %p62
      $region26: #{model_forward.5} parent=19 // pred_check_branch
        %302 = sbr.rel (%p300) target = $region28
      $region27: #{model_forward.5} parent=19 // pred_region
        %p303 = scmp.lt.s32.totalorder %s16, 1
        %s304 = scalar_select %p303, %s16, 1
        %s305 = smul.addr %s304, 4
        %s306 = scalar_lea.vmem %s1, %s305
      $region28: #{model_forward.5} parent=19 // pred_fallthru
        _
      // Predicated region
      $region29: #{model_forward.5} parent=19 // pred_check
        %p307 = pneg %p88
      $region30: #{model_forward.5} parent=19 // pred_check_branch
        %309 = sbr.rel (%p307) target = $region32
      $region31: #{model_forward.5} parent=19 // pred_region
        %p310 = scmp.lt.s32.totalorder %s16, 1
        %s311 = scalar_select %p310, %s16, 1
        %s312 = scalar_lea.vmem %s2, %s311
      $region32: #{model_forward.5} parent=19 // pred_fallthru
        _
      // Predicated region
      $region33: #{model_forward.5} parent=19 // pred_check
        %p313 = pneg %p114
      $region34: #{model_forward.5} parent=19 // pred_check_branch
        %315 = sbr.rel (%p313) target = $region36
      $region35: #{model_forward.5} parent=19 // pred_region
        %p316 = scmp.lt.s32.totalorder %s16, 1
        %s317 = scalar_select %p316, %s16, 1
        %s318 = smul.addr %s317, 4
        %s319 = scalar_lea.vmem %s3, %s318
      $region36: #{model_forward.5} parent=19 // pred_fallthru
        _
      // Predicated region
      $region37: #{model_forward.5} parent=19 // pred_check
        %p320 = pneg %p140
      $region38: #{model_forward.5} parent=19 // pred_check_branch
        %322 = sbr.rel (%p320) target = $region40
      $region39: #{model_forward.5} parent=19 // pred_region
        %p323 = scmp.lt.s32.totalorder %s16, 1
        %s324 = scalar_select %p323, %s16, 1
        %s325 = smul.addr %s324, 4
        %s326 = scalar_lea.vmem %s4, %s325
      $region40: #{model_forward.5} parent=19 // pred_fallthru
        _
    $region20: #{model_forward.5} parent=5 // pred_fallthru
      _
    %p327 = scmp.le.s32.totalorder 1, %s16
    %p328 = scmp.lt.s32.totalorder %s16, 3
    %p329 = pnand %p327, %p328
    %p330 = pneg %p329
    // Predicated region
    $region41: #{model_forward.5} parent=5 // pred_check
      _
    $region42: #{model_forward.5} parent=5 // pred_check_branch
      %332 = sbr.rel (%p329) target = $region44
    $region43: #{model_forward.5} parent=5 // pred_region
      %s333 = ssub.s32 %s16, 1
      %p334 = scmp.lt.s32.totalorder %s21, 1
      %s335 = scalar_select %p334, %s21, 1
      %s336 = smul.addr %s335, 2
      %s337 = scalar_lea.vmem %s0, %s336
      %p338 = pneg %p42
      %p339 = pneg %p39
      %p340 = scmp.lt.s32.totalorder %s21, 1
      %s341 = scalar_select %p340, %s21, 1
      %s342 = smul.addr %s341, 4
      %s343 = scalar_lea.vmem %s1, %s342
      %p344 = pneg %p68
      %p345 = pneg %p65
      %p346 = scmp.lt.s32.totalorder %s21, 1
      %s347 = scalar_select %p346, %s21, 1
      %s348 = scalar_lea.vmem %s2, %s347
      %p349 = pneg %p94
      %p350 = pneg %p91
      %p351 = scmp.lt.s32.totalorder %s21, 1
      %s352 = scalar_select %p351, %s21, 1
      %s353 = smul.addr %s352, 4
      %s354 = scalar_lea.vmem %s3, %s353
      %p355 = pneg %p120
      %p356 = pneg %p117
      %p357 = scmp.lt.s32.totalorder %s21, 1
      %s358 = scalar_select %p357, %s21, 1
      %s359 = smul.addr %s358, 4
      %s360 = scalar_lea.vmem %s4, %s359
      %p361 = pneg %p146
      %p362 = pneg %p143
      %p363 = pneg %p167
      %p364 = pneg %p164
      %p365 = pneg %p193
      %p366 = pneg %p190
      %p367 = scmp.lt.s32.totalorder %s21, 1
      %s368 = scalar_select %p367, %s21, 1
      %s369 = smul.addr %s368, 2
      %s370 = scalar_lea.vmem %s6, %s369
      %p371 = pneg %p219
      %p372 = pneg %p216
      %p373 = scmp.lt.s32.totalorder %s21, 1
      %s374 = scalar_select %p373, %s21, 1
      %s375 = smul.addr %s374, 4
      %s376 = scalar_lea.vmem %s7, %s375
      %p377 = pneg %p245
      %p378 = pneg %p242
      %p379 = scmp.lt.s32.totalorder %s21, 1
      %s380 = scalar_select %p379, %s21, 1
      %s381 = smul.addr %s380, 4
      %s382 = scalar_lea.vmem %s8, %s381
      %p383 = pneg %p271
      %p384 = pneg %p268
      %p385 = scmp.lt.s32.totalorder %s21, 1
      %s386 = scalar_select %p385, %s21, 1
      %s387 = scalar_lea.vmem %s9, %s386
      %p388 = scmp.lt.s32.totalorder %s21, 1
      %s389 = scalar_select %p388, %s21, 1
      %s390 = smul.addr %s389, 2
      %s391 = scalar_lea.vmem %s0, %s390
      %p392 = scmp.lt.s32.totalorder %s21, 1
      %s393 = scalar_select %p392, %s21, 1
      %s394 = smul.addr %s393, 4
      %s395 = scalar_lea.vmem %s1, %s394
      %p396 = scmp.lt.s32.totalorder %s21, 1
      %s397 = scalar_select %p396, %s21, 1
      %s398 = scalar_lea.vmem %s2, %s397
      %p399 = scmp.lt.s32.totalorder %s21, 1
      %s400 = scalar_select %p399, %s21, 1
      %s401 = smul.addr %s400, 4
      %s402 = scalar_lea.vmem %s3, %s401
      %p403 = scmp.lt.s32.totalorder %s21, 1
      %s404 = scalar_select %p403, %s21, 1
      %s405 = smul.addr %s404, 4
      %s406 = scalar_lea.vmem %s4, %s405
      %p407 = scmp.lt.s32.totalorder %s21, 1
      %s408 = scalar_select %p407, %s21, 1
      %s409 = smul.addr %s408, 2
      %s410 = scalar_lea.vmem %s6, %s409
      %p411 = scmp.lt.s32.totalorder %s21, 1
      %s412 = scalar_select %p411, %s21, 1
      %s413 = smul.addr %s412, 4
      %s414 = scalar_lea.vmem %s7, %s413
      %p415 = scmp.lt.s32.totalorder %s21, 1
      %s416 = scalar_select %p415, %s21, 1
      %s417 = smul.addr %s416, 4
      %s418 = scalar_lea.vmem %s8, %s417
      %p419 = scmp.lt.s32.totalorder %s21, 1
      %s420 = scalar_select %p419, %s21, 1
      %s421 = scalar_lea.vmem %s9, %s420
      %v423 = vld [vmem:[%s395] sm:$0xf]
      %v424 = vld [vmem:[%s398] sm:$0x1]
      %426 = vset.pattern.permute.xlu0 0
      %427 = vperm.xlu0 %426, %v423
      %v428 = vpop.permute.xlu0 %427
      %v431 = vlaneseq
      %v432 = vshrl.u32 %v431, 7
      %v433 = vsub.s32 0, %v432
      %v434 = vrot.slane %v424, %v433
      %v436 = vadd.f32 %v428, %v434
      %vm437 = vcmp.gt.f32.partialorder %v436, 0.0
      %v438 = vmul.f32 %v436, 0.2
      %v439 = vsel %vm437, %v436, %v438
      %v440 = vld [vmem:[%s391] sm:$0x3]
      %v441 = vunpack.c.l.bf16 %v440
      %v442 = vadd.f32 %v439, %v441
      %vm443 = vcmask 27648
      %v444 = vsel %vm443, %v442, -inf
      %445 = vmax.xlane.f32.xlu0 %v444
      %v446 = vpop.xlane.xlu0 %445
      %v447 = vsub.f32 %v442, %v446
      %v448 = vmul.f32 %v447, 1.442695
      %v449 = vpow.pop %v448
      %v450 = vsel %vm443, %v449, 0.0
      %451 = vadd.xlane.f32.xlu0 %v450
      %v452 = vpop.xlane.xlu0 %451
      %v453 = vrcp.pop %v452
      %v454 = vmul.f32 %v449, %v453
      %v455 = vpack.c.bf16 %v454, %v454
      %vm456 = vcmask 25600
      %457 = vst.msk [vmem:[%s410] sm:$0x3] %vm456, %v455
      %v458 = vsel %vm443, %v454, 0.0
      %459 = vadd.xlane.f32.xlu0 %v458
      %v460 = vpop.xlane.xlu0 %459
      %vm461 = vcmp.gt.f32.partialorder %v460, 0.0
      %v462 = vmax.f32 %v460, 1e-12
      %v463 = vrsqrt.pop %v462
      %v464 = vsel %vm461, %v463, 0.0
      %v465 = vld [vmem:[%s406] sm:$0xf]
      %v466 = vmul.f32 %v465, %v464
      %v467 = vpack.c.bf16 %v466, %v466
      %vm468 = vcmask 31744
      %v470 = vsel %vm468, %v455, 0
      %vm472 = vcmask 1041408
      %v474 = vsel %vm472, %v467, 0
      %476 = vmatprep.subr.bf16.mxu0 0
      %477 = vmatpush1.bf16.msra.mxu0 %v474
      %478 = vmatprep.subr.bf16.mxu0 0
      %479 = vmatpush1.bf16.msra.mxu0 0
      %480 = vmatprep.subr.bf16.mxu0 0
      %481 = vmatpush1.bf16.msra.mxu0 0
      %482 = vmatprep.subr.bf16.mxu0 0
      %483 = vmatpush1.bf16.msra.mxu0 0
      %484 = vmatprep.subr.bf16.mxu0 0
      %485 = vmatpush1.bf16.msra.mxu0 0
      %486 = vmatprep.subr.bf16.mxu0 0
      %487 = vmatpush1.bf16.msra.mxu0 0
      %488 = vmatprep.subr.bf16.mxu0 0
      %489 = vmatpush1.bf16.msra.mxu0 0
      %490 = vmatprep.subr.bf16.mxu0 0
      %491 = vmatpush1.bf16.msra.mxu0 0
      %492 = vmatprep.subr.bf16.mxu0 0
      %493 = vmatpush1.bf16.msra.mxu0 0
      %494 = vmatprep.subr.bf16.mxu0 0
      %495 = vmatpush1.bf16.msra.mxu0 0
      %496 = vmatprep.subr.bf16.mxu0 0
      %497 = vmatpush1.bf16.msra.mxu0 0
      %498 = vmatprep.subr.bf16.mxu0 0
      %499 = vmatpush1.bf16.msra.mxu0 0
      %500 = vmatprep.subr.bf16.mxu0 0
      %501 = vmatpush1.bf16.msra.mxu0 0
      %502 = vmatprep.subr.bf16.mxu0 0
      %503 = vmatpush1.bf16.msra.mxu0 0
      %504 = vmatprep.subr.bf16.mxu0 0
      %505 = vmatpush1.bf16.msra.mxu0 0
      %506 = vmatprep.subr.bf16.mxu0 0
      %507 = vmatpush1.bf16.msra.mxu0 0
      %508 = vmatprep.mubr.bf16.mxu0 0
      %509 = vmatmul.mubr.bf16.gmra.mrb[0].mxu0 %v470
      %v510 = vpop.f32.mrb[0].mxu0
      %v511 = vadd.f32 0.0, %v510
      %v512 = vpop.f32.mrb[0].mxu0
      %v513 = vpop.f32.mrb[0].mxu0
      %v514 = vpop.f32.mrb[0].mxu0
      %515 = vdwg.mxu0
      %v516 = vmul.f32 %v464, %v511
      %v517 = vld [vmem:[%s5] sm:$0x1]
      %v519 = vlaneseq
      %v520 = vshrl.u32 %v519, 7
      %v521 = vsub.s32 0, %v520
      %v522 = vrot.slane %v517, %v521
      %v524 = vadd.f32 %v516, %v522
      %v525 = vmax.f32 %v524, 0.0
      %vm526 = vcmask 257024
      %527 = vst.msk [vmem:[%s414] sm:$0xf] %vm526, %v525
      %v528 = vmul.f32 %v525, %v464
      %v529 = vpack.c.bf16 %v528, %v528
      %v531 = vsel %vm472, %v529, 0
      %533 = vmatprep.subr.bf16.mxu0 0
      %534 = vmatpush1.bf16.msra.mxu0 %v531
      %535 = vmatprep.subr.bf16.mxu0 0
      %536 = vmatpush1.bf16.msra.mxu0 0
      %537 = vmatprep.subr.bf16.mxu0 0
      %538 = vmatpush1.bf16.msra.mxu0 0
      %539 = vmatprep.subr.bf16.mxu0 0
      %540 = vmatpush1.bf16.msra.mxu0 0
      %541 = vmatprep.subr.bf16.mxu0 0
      %542 = vmatpush1.bf16.msra.mxu0 0
      %543 = vmatprep.subr.bf16.mxu0 0
      %544 = vmatpush1.bf16.msra.mxu0 0
      %545 = vmatprep.subr.bf16.mxu0 0
      %546 = vmatpush1.bf16.msra.mxu0 0
      %547 = vmatprep.subr.bf16.mxu0 0
      %548 = vmatpush1.bf16.msra.mxu0 0
      %549 = vmatprep.subr.bf16.mxu0 0
      %550 = vmatpush1.bf16.msra.mxu0 0
      %551 = vmatprep.subr.bf16.mxu0 0
      %552 = vmatpush1.bf16.msra.mxu0 0
      %553 = vmatprep.subr.bf16.mxu0 0
      %554 = vmatpush1.bf16.msra.mxu0 0
      %555 = vmatprep.subr.bf16.mxu0 0
      %556 = vmatpush1.bf16.msra.mxu0 0
      %557 = vmatprep.subr.bf16.mxu0 0
      %558 = vmatpush1.bf16.msra.mxu0 0
      %559 = vmatprep.subr.bf16.mxu0 0
      %560 = vmatpush1.bf16.msra.mxu0 0
      %561 = vmatprep.subr.bf16.mxu0 0
      %562 = vmatpush1.bf16.msra.mxu0 0
      %563 = vmatprep.subr.bf16.mxu0 0
      %564 = vmatpush1.bf16.msra.mxu0 0
      %565 = vmatprep.mubr.bf16.mxu0 0
      %566 = vmatmul.mubr.bf16.gmra.mrb[0].mxu0 %v470
      %v567 = vpop.f32.mrb[0].mxu0
      %v568 = vadd.f32 0.0, %v567
      %v569 = vpop.f32.mrb[0].mxu0
      %v570 = vpop.f32.mrb[0].mxu0
      %v571 = vpop.f32.mrb[0].mxu0
      %572 = vdwg.mxu0
      %v573 = vmul.f32 %v464, %v568
      %v574 = vsub.f32 %v525, %v573
      %v575 = vand.u32 2147483647, %v574
      %v576 = vsel %vm526, %v575, 0.0
      %577 = vadd.xlane.f32.xlu0 %v576
      %v578 = vpop.xlane.xlu0 %577
      %vm579 = vcmask 3072
      %580 = vst.msk [vmem:[%s418] sm:$0xf] %vm579, %v578
      %v581 = vld [vmem:[%s402] sm:$0xf]
      %v582 = vsel %vm526, %v581, -inf
      %v583 = vrot.slane %v582, 4
      %v584 = vmax.f32 %v582, %v583
      %v585 = vrot.slane %v584, 2
      %v586 = vmax.f32 %v584, %v585
      %v587 = vrot.slane %v586, 1
      %v588 = vmax.f32 %v586, %v587
      %v589 = vmax.f32 %v588, 0.0
      %vm590 = vcmask 253952
      %591 = vst.msk [vmem:[%s421] sm:$0x1] %vm590, %v589
      %v592 = vsel %vm526, %v581, 0.0
      %v593 = vrot.slane %v592, 4
      %v594 = vadd.f32 %v592, %v593
      %v595 = vrot.slane %v594, 2
      %v596 = vadd.f32 %v594, %v595
      %v597 = vrot.slane %v596, 1
      %v598 = vadd.f32 %v596, %v597
      %v599 = vmul.f32 %v598, 0.25
      %v600 = vmax.f32 %v599, 0.0
      %602 = vrot.lane.b32.xlu0 %v600, 32
      %v603 = vpop.permute.xlu0 %602
      %vm605 = vcmask 516352
      %606 = vst.msk [vmem:[%s421] sm:$0x1] %vm605, %v603
      %p607 = scmp.lt.s32.totalorder %s21, 1
      %s608 = scalar_select %p607, %s21, 1
      %s609 = smul.addr %s608, 2
      %s610 = scalar_lea.vmem %s6, %s609
      %p611 = scmp.lt.s32.totalorder %s21, 1
      %s612 = scalar_select %p611, %s21, 1
      %s613 = smul.addr %s612, 4
      %s614 = scalar_lea.vmem %s7, %s613
      %p615 = scmp.lt.s32.totalorder %s21, 1
      %s616 = scalar_select %p615, %s21, 1
      %s617 = smul.addr %s616, 4
      %s618 = scalar_lea.vmem %s8, %s617
      %p619 = scmp.lt.s32.totalorder %s21, 1
      %s620 = scalar_select %p619, %s21, 1
      %s621 = scalar_lea.vmem %s9, %s620
      // Predicated region
      $region45: #{model_forward.5} parent=43 // pred_check
        %p622 = pneg %p190
      $region46: #{model_forward.5} parent=43 // pred_check_branch
        %624 = sbr.rel (%p622) target = $region48
      $region47: #{model_forward.5} parent=43 // pred_region
        _
      $region48: #{model_forward.5} parent=43 // pred_fallthru
        _
      // Predicated region
      $region49: #{model_forward.5} parent=43 // pred_check
        %p625 = pneg %p216
      $region50: #{model_forward.5} parent=43 // pred_check_branch
        %627 = sbr.rel (%p625) target = $region52
      $region51: #{model_forward.5} parent=43 // pred_region
        _
      $region52: #{model_forward.5} parent=43 // pred_fallthru
        _
      // Predicated region
      $region53: #{model_forward.5} parent=43 // pred_check
        %p628 = pneg %p242
      $region54: #{model_forward.5} parent=43 // pred_check_branch
        %630 = sbr.rel (%p628) target = $region56
      $region55: #{model_forward.5} parent=43 // pred_region
        _
      $region56: #{model_forward.5} parent=43 // pred_fallthru
        _
      // Predicated region
      $region57: #{model_forward.5} parent=43 // pred_check
        %p631 = pneg %p268
      $region58: #{model_forward.5} parent=43 // pred_check_branch
        %633 = sbr.rel (%p631) target = $region60
      $region59: #{model_forward.5} parent=43 // pred_region
        _
      $region60: #{model_forward.5} parent=43 // pred_fallthru
        _
    $region44: #{model_forward.5} parent=5 // pred_fallthru
      _
    %p634 = scmp.le.s32.totalorder 2, %s16
    // Predicated region
    $region61: #{model_forward.5} parent=5 // pred_check
      %p635 = pneg %p634
    $region62: #{model_forward.5} parent=5 // pred_check_branch
      %637 = sbr.rel (%p635) target = $region64
    $region63: #{model_forward.5} parent=5 // pred_region
      %s638 = ssub.s32 %s16, 2
      // Predicated region
      $region65: #{model_forward.5} parent=63 // pred_check
        %p639 = pneg %p196
      $region66: #{model_forward.5} parent=63 // pred_check_branch
        %641 = sbr.rel (%p639) target = $region68
      $region67: #{model_forward.5} parent=63 // pred_region
        %p642 = scmp.lt.s32.totalorder %s22, 1
        %s643 = scalar_select %p642, %s22, 1
        %s644 = smul.addr %s643, 2
        %s645 = scalar_lea.vmem %s6, %s644
      $region68: #{model_forward.5} parent=63 // pred_fallthru
        _
      // Predicated region
      $region69: #{model_forward.5} parent=63 // pred_check
        %p646 = pneg %p222
      $region70: #{model_forward.5} parent=63 // pred_check_branch
        %648 = sbr.rel (%p646) target = $region72
      $region71: #{model_forward.5} parent=63 // pred_region
        %p649 = scmp.lt.s32.totalorder %s22, 1
        %s650 = scalar_select %p649, %s22, 1
        %s651 = smul.addr %s650, 4
        %s652 = scalar_lea.vmem %s7, %s651
      $region72: #{model_forward.5} parent=63 // pred_fallthru
        _
      // Predicated region
      $region73: #{model_forward.5} parent=63 // pred_check
        %p653 = pneg %p248
      $region74: #{model_forward.5} parent=63 // pred_check_branch
        %655 = sbr.rel (%p653) target = $region76
      $region75: #{model_forward.5} parent=63 // pred_region
        %p656 = scmp.lt.s32.totalorder %s22, 1
        %s657 = scalar_select %p656, %s22, 1
        %s658 = smul.addr %s657, 4
        %s659 = scalar_lea.vmem %s8, %s658
      $region76: #{model_forward.5} parent=63 // pred_fallthru
        _
      // Predicated region
      $region77: #{model_forward.5} parent=63 // pred_check
        %p660 = pneg %p274
      $region78: #{model_forward.5} parent=63 // pred_check_branch
        %662 = sbr.rel (%p660) target = $region80
      $region79: #{model_forward.5} parent=63 // pred_region
        %p663 = scmp.lt.s32.totalorder %s22, 1
        %s664 = scalar_select %p663, %s22, 1
        %s665 = scalar_lea.vmem %s9, %s664
      $region80: #{model_forward.5} parent=63 // pred_fallthru
        _
    $region64: #{model_forward.5} parent=5 // pred_fallthru
      _
  $region6: #{model_forward.5} parent=0 // loop_footer
    %s20 = sadd.s32 1, %s16
  $region7: #{model_forward.5} parent=0 // loop_footer_branch
    %15 = sbr.rel target = $region3
  $region8: #{model_forward.5} parent=0 // loop_exit
    _

// kernel: model_forward.7
$region0: #{model_forward.7}
  #allocation0 [shape = 'u32[]', space=smem, size = 0x4, offset = 0x4, fixed_abs, tag = 'smem constant byte address 0x4 - core index']
  #allocation1 [shape = 'u32[144,128]{1,0:T(1,128)}', space=vmem, size = 0x12000, scoped, tag = 'internal scratch']
  %s0 = inlined_call_operand.vmem [shape: f32[2,64], index: 0, kind: input, shape index: {}]
  %s1 = inlined_call_operand.vmem [shape: f32[2,64], index: 1, kind: input, shape index: {}]
  %s2 = inlined_call_operand.vmem [shape: f32[64,32], index: 2, kind: input, shape index: {}]
  %s3 = inlined_call_operand.vmem [shape: f32[1,32], index: 3, kind: input, shape index: {}]
  %s4 = inlined_call_operand.vmem [shape: f32[32,32], index: 4, kind: input, shape index: {}]
  %s5 = inlined_call_operand.vmem [shape: f32[1,32], index: 5, kind: input, shape index: {}]
  %s6 = inlined_call_operand.hbm [shape: f32[2,32], index: 6, kind: output, shape index: {0}]
  %s7 = inlined_call_operand.hbm [shape: f32[2,64], index: 7, kind: output, shape index: {1}]
  %8 = xla_tuple %s6, %s7
  %s9 = sld [smem:[#allocation0]]
  $region42: #{model_forward.7} parent=0
    _
  %s11 = ssub.s32 1, %s9
  %s12 = scalar_select 0, %s11, %s9
  $region1: #{model_forward.7} parent=0
    #allocation2 [shape = 'u8[1024]{0}', space=vmem, size = 0x400, scoped, tag = 'output window, operand 0, single buffered']
    #allocation3 [shape = 's32[1]{0}', space=sflag, size = 0x4, scoped, tag = 'scoped memory for model_forward.7']
    #allocation4 [shape = 'u8[1024]{0}', space=vmem, size = 0x400, scoped, tag = 'output window, operand 1, single buffered']
    #allocation5 [shape = 's32[1]{0}', space=sflag, size = 0x4, scoped, tag = 'scoped memory for model_forward.7']
    %13 = vsyncpa [#allocation3], 0
    %14 = vsyncpa [#allocation5], 0
    // Predicated region
    $region2: #{model_forward.7} parent=1 // pred_check
      _
    $region3: #{model_forward.7} parent=1 // pred_check_branch
      %16 = sbr.rel (0) target = $region5
    $region4: #{model_forward.7} parent=1 // pred_region
      _
    $region5: #{model_forward.7} parent=1 // pred_fallthru
      _
    // Predicated region
    $region6: #{model_forward.7} parent=1 // pred_check
      _
    $region7: #{model_forward.7} parent=1 // pred_check_branch
      %18 = sbr.rel (0) target = $region9
    $region8: #{model_forward.7} parent=1 // pred_region
      _
    $region9: #{model_forward.7} parent=1 // pred_fallthru
      _
    // Predicated region
    $region10: #{model_forward.7} parent=1 // pred_check
      _
    $region11: #{model_forward.7} parent=1 // pred_check_branch
      %20 = sbr.rel (0) target = $region13
    $region12: #{model_forward.7} parent=1 // pred_region
      _
    $region13: #{model_forward.7} parent=1 // pred_fallthru
      _
    // Predicated region
    $region14: #{model_forward.7} parent=1 // pred_check
      _
    $region15: #{model_forward.7} parent=1 // pred_check_branch
      %22 = sbr.rel (0) target = $region17
    $region16: #{model_forward.7} parent=1 // pred_region
      _
    $region17: #{model_forward.7} parent=1 // pred_fallthru
      _
    // Predicated region
    $region18: #{model_forward.7} parent=1 // pred_check
      _
    $region19: #{model_forward.7} parent=1 // pred_check_branch
      %24 = sbr.rel (0) target = $region21
    $region20: #{model_forward.7} parent=1 // pred_region
      _
    $region21: #{model_forward.7} parent=1 // pred_fallthru
      _
    // Predicated region
    $region22: #{model_forward.7} parent=1 // pred_check
      _
    $region23: #{model_forward.7} parent=1 // pred_check_branch
      %26 = sbr.rel (0) target = $region25
    $region24: #{model_forward.7} parent=1 // pred_region
      _
    $region25: #{model_forward.7} parent=1 // pred_fallthru
      _
    %v27 = vld [vmem:[%s0] sm:$0x3]
    %v28 = vld [vmem:[%s1] sm:$0x3]
    %v29 = vadd.f32 %v27, %v28
    %vm30 = vcmask 517120
    %31 = vst.msk [vmem:[#allocation4] sm:$0x3] %vm30, %v29
    %v32 = vld [vmem:[%s2] sm:$0xff]
    %v33 = vld [vmem:[%s2 + $0x8] sm:$0xff]
    %v34 = vld [vmem:[%s2 + $0x10] sm:$0xff]
    %v35 = vld [vmem:[%s2 + $0x18] sm:$0xff]
    %v36 = vld [vmem:[%s2 + $0x20] sm:$0xff]
    %v37 = vld [vmem:[%s2 + $0x28] sm:$0xff]
    %v38 = vld [vmem:[%s2 + $0x30] sm:$0xff]
    %v39 = vld [vmem:[%s2 + $0x38] sm:$0xff]
    %v40 = vld [vmem:[%s3] sm:$0x1]
    %v42 = vlaneseq
    %v43 = vshrl.u32 %v42, 7
    %v44 = vsub.s32 0, %v43
    %v45 = vrot.slane %v40, %v44
    %vm47 = vcmask 523264
    %v49 = vsel %vm47, %v29, 0
    %51 = vmatprep.subr.mxu0 0.0
    %52 = vmatpush1.msra.mxu0 %v32
    %53 = vmatprep.subr.mxu0 0.0
    %54 = vmatpush1.msra.mxu0 %v33
    %55 = vmatprep.subr.mxu0 0.0
    %56 = vmatpush1.msra.mxu0 %v34
    %57 = vmatprep.subr.mxu0 0.0
    %58 = vmatpush1.msra.mxu0 %v35
    %59 = vmatprep.subr.mxu0 0.0
    %60 = vmatpush1.msra.mxu0 %v36
    %61 = vmatprep.subr.mxu0 0.0
    %62 = vmatpush1.msra.mxu0 %v37
    %63 = vmatprep.subr.mxu0 0.0
    %64 = vmatpush1.msra.mxu0 %v38
    %65 = vmatprep.subr.mxu0 0.0
    %66 = vmatpush1.msra.mxu0 %v39
    %67 = vmatprep.subr.mxu0 0.0
    %68 = vmatpush1.msra.mxu0 0.0
    %69 = vmatprep.subr.mxu0 0.0
    %70 = vmatpush1.msra.mxu0 0.0
    %71 = vmatprep.subr.mxu0 0.0
    %72 = vmatpush1.msra.mxu0 0.0
    %73 = vmatprep.subr.mxu0 0.0
    %74 = vmatpush1.msra.mxu0 0.0
    %75 = vmatprep.subr.mxu0 0.0
    %76 = vmatpush1.msra.mxu0 0.0
    %77 = vmatprep.subr.mxu0 0.0
    %78 = vmatpush1.msra.mxu0 0.0
    %79 = vmatprep.subr.mxu0 0.0
    %80 = vmatpush1.msra.mxu0 0.0
    %81 = vmatprep.subr.mxu0 0.0
    %82 = vmatpush1.msra.mxu0 0.0
    %83 = vmatprep.subr.mxu0 0.0
    %84 = vmatpush1.msra.mxu0 0.0
    %85 = vmatprep.subr.mxu0 0.0
    %86 = vmatpush1.msra.mxu0 0.0
    %87 = vmatprep.subr.mxu0 0.0
    %88 = vmatpush1.msra.mxu0 0.0
    %89 = vmatprep.subr.mxu0 0.0
    %90 = vmatpush1.msra.mxu0 0.0
    %91 = vmatprep.subr.mxu0 0.0
    %92 = vmatpush1.msra.mxu0 0.0
    %93 = vmatprep.subr.mxu0 0.0
    %94 = vmatpush1.msra.mxu0 0.0
    %95 = vmatprep.subr.mxu0 0.0
    %96 = vmatpush1.msra.mxu0 0.0
    %97 = vmatprep.subr.mxu0 0.0
    %98 = vmatpush1.msra.mxu0 0.0
    %99 = vmatprep.subr.mxu0 0.0
    %100 = vmatpush1.msra.mxu0 0.0
    %101 = vmatprep.subr.mxu0 0.0
    %102 = vmatpush1.msra.mxu0 0.0
    %103 = vmatprep.subr.mxu0 0.0
    %104 = vmatpush1.msra.mxu0 0.0
    %105 = vmatprep.subr.mxu0 0.0
    %106 = vmatpush1.msra.mxu0 0.0
    %107 = vmatprep.subr.mxu0 0.0
    %108 = vmatpush1.msra.mxu0 0.0
    %109 = vmatprep.subr.mxu0 0.0
    %110 = vmatpush1.msra.mxu0 0.0
    %111 = vmatprep.subr.mxu0 0.0
    %112 = vmatpush1.msra.mxu0 0.0
    %113 = vmatprep.subr.mxu0 0.0
    %114 = vmatpush1.msra.mxu0 0.0
    %115 = vmatprep.mubr.f32.mxu0 0.0
    %116 = vmatmul.mubr.f32.gmra.mrb[0].mxu0 %v49
    %v117 = vpop.f32.mrb[0].mxu0
    %v118 = vadd.f32 %v45, %v117
    %v119 = vpop.f32.mrb[0].mxu0
    %120 = vdwg.mxu0
    %v121 = vmax.f32 %v118, 0.0
    %v122 = vld [vmem:[%s4] sm:$0xff]
    %v123 = vld [vmem:[%s4 + $0x8] sm:$0xff]
    %v124 = vld [vmem:[%s4 + $0x10] sm:$0xff]
    %v125 = vld [vmem:[%s4 + $0x18] sm:$0xff]
    %v126 = vld [vmem:[%s5] sm:$0x1]
    %v128 = vlaneseq
    %v129 = vshrl.u32 %v128, 7
    %v130 = vsub.s32 0, %v129
    %v131 = vrot.slane %v126, %v130
    %vm133 = vcmask 261120
    %v135 = vsel %vm133, %v121, 0
    %137 = vmatprep.subr.mxu0 0.0
    %138 = vmatpush1.msra.mxu0 %v122
    %139 = vmatprep.subr.mxu0 0.0
    %140 = vmatpush1.msra.mxu0 %v123
    %141 = vmatprep.subr.mxu0 0.0
    %142 = vmatpush1.msra.mxu0 %v124
    %143 = vmatprep.subr.mxu0 0.0
    %144 = vmatpush1.msra.mxu0 %v125
    %145 = vmatprep.subr.mxu0 0.0
    %146 = vmatpush1.msra.mxu0 0.0
    %147 = vmatprep.subr.mxu0 0.0
    %148 = vmatpush1.msra.mxu0 0.0
    %149 = vmatprep.subr.mxu0 0.0
    %150 = vmatpush1.msra.mxu0 0.0
    %151 = vmatprep.subr.mxu0 0.0
    %152 = vmatpush1.msra.mxu0 0.0
    %153 = vmatprep.subr.mxu0 0.0
    %154 = vmatpush1.msra.mxu0 0.0
    %155 = vmatprep.subr.mxu0 0.0
    %156 = vmatpush1.msra.mxu0 0.0
    %157 = vmatprep.subr.mxu0 0.0
    %158 = vmatpush1.msra.mxu0 0.0
    %159 = vmatprep.subr.mxu0 0.0
    %160 = vmatpush1.msra.mxu0 0.0
    %161 = vmatprep.subr.mxu0 0.0
    %162 = vmatpush1.msra.mxu0 0.0
    %163 = vmatprep.subr.mxu0 0.0
    %164 = vmatpush1.msra.mxu0 0.0
    %165 = vmatprep.subr.mxu0 0.0
    %166 = vmatpush1.msra.mxu0 0.0
    %167 = vmatprep.subr.mxu0 0.0
    %168 = vmatpush1.msra.mxu0 0.0
    %169 = vmatprep.subr.mxu0 0.0
    %170 = vmatpush1.msra.mxu0 0.0
    %171 = vmatprep.subr.mxu0 0.0
    %172 = vmatpush1.msra.mxu0 0.0
    %173 = vmatprep.subr.mxu0 0.0
    %174 = vmatpush1.msra.mxu0 0.0
    %175 = vmatprep.subr.mxu0 0.0
    %176 = vmatpush1.msra.mxu0 0.0
    %177 = vmatprep.subr.mxu0 0.0
    %178 = vmatpush1.msra.mxu0 0.0
    %179 = vmatprep.subr.mxu0 0.0
    %180 = vmatpush1.msra.mxu0 0.0
    %181 = vmatprep.subr.mxu0 0.0
    %182 = vmatpush1.msra.mxu0 0.0
    %183 = vmatprep.subr.mxu0 0.0
    %184 = vmatpush1.msra.mxu0 0.0
    %185 = vmatprep.subr.mxu0 0.0
    %186 = vmatpush1.msra.mxu0 0.0
    %187 = vmatprep.subr.mxu0 0.0
    %188 = vmatpush1.msra.mxu0 0.0
    %189 = vmatprep.subr.mxu0 0.0
    %190 = vmatpush1.msra.mxu0 0.0
    %191 = vmatprep.subr.mxu0 0.0
    %192 = vmatpush1.msra.mxu0 0.0
    %193 = vmatprep.subr.mxu0 0.0
    %194 = vmatpush1.msra.mxu0 0.0
    %195 = vmatprep.subr.mxu0 0.0
    %196 = vmatpush1.msra.mxu0 0.0
    %197 = vmatprep.subr.mxu0 0.0
    %198 = vmatpush1.msra.mxu0 0.0
    %199 = vmatprep.subr.mxu0 0.0
    %200 = vmatpush1.msra.mxu0 0.0
    %201 = vmatprep.mubr.f32.mxu0 0.0
    %202 = vmatmul.mubr.f32.gmra.mrb[0].mxu0 %v135
    %v203 = vpop.f32.mrb[0].mxu0
    %v204 = vadd.f32 %v131, %v203
    %v205 = vpop.f32.mrb[0].mxu0
    %206 = vdwg.mxu0
    %vm207 = vcmask 254976
    %208 = vst.msk [vmem:[#allocation2] sm:$0x3] %vm207, %v204
    // Predicated region
    $region26: #{model_forward.7} parent=1 // pred_check
      _
    $region27: #{model_forward.7} parent=1 // pred_check_branch
      %210 = sbr.rel (0) target = $region29
    $region28: #{model_forward.7} parent=1 // pred_region
      %s212 = ssub.s32 32, 32
      %213 = vsyncadd [#allocation3], %s212
      %s215 = sshll.u32 [#allocation2], 4
      %s216 = int_to_ptr.vmem [resolvable:$true] %s215
      %218 = dma.vmem_to_hbm [thread:$0]  %s216, 32, %s6, [#allocation3]
    $region29: #{model_forward.7} parent=1 // pred_fallthru
      _
    // Predicated region
    $region30: #{model_forward.7} parent=1 // pred_check
      _
    $region31: #{model_forward.7} parent=1 // pred_check_branch
      %220 = sbr.rel (0) target = $region33
    $region32: #{model_forward.7} parent=1 // pred_region
      %s222 = ssub.s32 32, 32
      %223 = vsyncadd [#allocation5], %s222
      %s225 = sshll.u32 [#allocation4], 4
      %s226 = int_to_ptr.vmem [resolvable:$true] %s225
      %228 = dma.vmem_to_hbm [thread:$0]  %s226, 32, %s7, [#allocation5]
    $region33: #{model_forward.7} parent=1 // pred_fallthru
      _
    // Predicated region
    $region34: #{model_forward.7} parent=1 // pred_check
      _
    $region35: #{model_forward.7} parent=1 // pred_check_branch
      %230 = sbr.rel (0) target = $region37
    $region36: #{model_forward.7} parent=1 // pred_region
      %231 = dma.done [#allocation3], 32
    $region37: #{model_forward.7} parent=1 // pred_fallthru
      _
    // Predicated region
    $region38: #{model_forward.7} parent=1 // pred_check
      _
    $region39: #{model_forward.7} parent=1 // pred_check_branch
      %233 = sbr.rel (0) target = $region41
    $region40: #{model_forward.7} parent=1 // pred_region
      %234 = dma.done [#allocation5], 32
    $region41: #{model_forward.7} parent=1 // pred_fallthru
      _
    %235 = vsyncpa [#allocation3], 1
    %236 = vsyncpa [#allocation5], 1

// kernel: model_forward.6
$region0: #{model_forward.6}
  #allocation0 [shape = 'u32[]', space=smem, size = 0x4, offset = 0x4, fixed_abs, tag = 'smem constant byte address 0x4 - core index']
  #allocation1 [shape = 'u32[144,128]{1,0:T(1,128)}', space=vmem, size = 0x12000, scoped, tag = 'internal scratch']
  %s0 = inlined_call_operand.vmem [shape: bf16[2,2,2], index: 0, kind: input, shape index: {}]
  %s1 = inlined_call_operand.vmem [shape: f32[2,2,1], index: 1, kind: input, shape index: {}]
  %s2 = inlined_call_operand.vmem [shape: f32[2,1,2], index: 2, kind: input, shape index: {}]
  %s3 = inlined_call_operand.vmem [shape: f32[2,2,32], index: 3, kind: input, shape index: {}]
  %s4 = inlined_call_operand.vmem [shape: f32[2,2,32], index: 4, kind: input, shape index: {}]
  %s5 = inlined_call_operand.vmem [shape: f32[1,1,32], index: 5, kind: input, shape index: {}]
  %s6 = inlined_call_operand.vmem [shape: f32[2,1,64], index: 6, kind: output, shape index: {}]
  %s7 = sld [smem:[#allocation0]]
  $region57: #{model_forward.6} parent=0
    _
  %s9 = ssub.s32 1, %s7
  %s10 = scalar_select 0, %s9, %s7
  loop: start=0, step=1, limit=4
  $region2: #{model_forward.6} parent=0 // loop_pre_header
    _
  $region3: #{model_forward.6} parent=0 // loop_header
    %s12 = sphi 0, %s16
    %p13 = scmp.ge.s32.totalorder %s12, 4
    %s22 = sphi 0, %s24
    %s25 = sphi 0, %s22
    %s26 = sphi 0, %s25
    %s42 = sphi 0, %s26
    %s48 = sphi 0, %s50
    %s51 = sphi 0, %s48
    %s52 = sphi 0, %s51
    %s68 = sphi 0, %s52
    %s74 = sphi 0, %s76
    %s77 = sphi 0, %s74
    %s78 = sphi 0, %s77
    %s94 = sphi 0, %s78
    %s100 = sphi 0, %s102
    %s103 = sphi 0, %s100
    %s104 = sphi 0, %s103
    %s120 = sphi 0, %s104
    %s126 = sphi 0, %s128
    %s129 = sphi 0, %s126
    %s130 = sphi 0, %s129
    %s146 = sphi 0, %s130
    %s150 = sphi 0, %s150
    %s152 = sphi 0, %s150
    %s153 = sphi 0, %s152
    %s167 = sphi 0, %s153
    %s173 = sphi 0, %s175
    %s176 = sphi 0, %s173
    %s177 = sphi 0, %s176
    %s193 = sphi 0, %s177
  $region4: #{model_forward.6} parent=0 // loop_header_branch
    %15 = sbr.rel (%p13) target = $region8
  $region5: #{model_forward.6} parent=0 // loop_body
    %s17 = ssub.s32 %s12, 1
    %s18 = ssub.s32 %s12, 2
    %s19 = sadd.s32 %s12, 1
    %s20 = ssub.s32 %s12, %s19
    %p21 = scmp.eq.s32.totalorder %s20, 0
    %s23 = sadd.s32 %s22, 1
    %s24 = scalar_select %p21, %s22, %s23
    %p27 = pneg %p21
    %p28 = scmp.eq.s32.totalorder %s12, 1
    %p29 = por %p27, %p28
    %p30 = scmp.ne.s32.totalorder %s22, %s25
    %p31 = scmp.eq.s32.totalorder %s12, 0
    %p32 = por %p30, %p31
    %p33 = scmp.ne.s32.totalorder %s22, %s25
    %p34 = scmp.eq.s32.totalorder %s17, 1
    %p35 = por %p33, %p34
    %p36 = scmp.ne.s32.totalorder %s25, %s26
    %p37 = scmp.eq.s32.totalorder %s17, 0
    %p38 = por %p36, %p37
    %p39 = scmp.ne.s32.totalorder %s25, %s26
    %p40 = scmp.eq.s32.totalorder %s18, 1
    %p41 = por %p39, %p40
    %p43 = scmp.ne.s32.totalorder %s26, %s42
    %p44 = scmp.eq.s32.totalorder %s18, 0
    %p45 = por %p43, %p44
    %s46 = ssub.s32 %s12, %s19
    %p47 = scmp.eq.s32.totalorder %s46, 0
    %s49 = sadd.s32 %s48, 1
    %s50 = scalar_select %p47, %s48, %s49
    %p53 = pneg %p47
    %p54 = scmp.eq.s32.totalorder %s12, 1
    %p55 = por %p53, %p54
    %p56 = scmp.ne.s32.totalorder %s48, %s51
    %p57 = scmp.eq.s32.totalorder %s12, 0
    %p58 = por %p56, %p57
    %p59 = scmp.ne.s32.totalorder %s48, %s51
    %p60 = scmp.eq.s32.totalorder %s17, 1
    %p61 = por %p59, %p60
    %p62 = scmp.ne.s32.totalorder %s51, %s52
    %p63 = scmp.eq.s32.totalorder %s17, 0
    %p64 = por %p62, %p63
    %p65 = scmp.ne.s32.totalorder %s51, %s52
    %p66 = scmp.eq.s32.totalorder %s18, 1
    %p67 = por %p65, %p66
    %p69 = scmp.ne.s32.totalorder %s52, %s68
    %p70 = scmp.eq.s32.totalorder %s18, 0
    %p71 = por %p69, %p70
    %s72 = ssub.s32 %s12, %s19
    %p73 = scmp.eq.s32.totalorder %s72, 0
    %s75 = sadd.s32 %s74, 1
    %s76 = scalar_select %p73, %s74, %s75
    %p79 = pneg %p73
    %p80 = scmp.eq.s32.totalorder %s12, 1
    %p81 = por %p79, %p80
    %p82 = scmp.ne.s32.totalorder %s74, %s77
    %p83 = scmp.eq.s32.totalorder %s12, 0
    %p84 = por %p82, %p83
    %p85 = scmp.ne.s32.totalorder %s74, %s77
    %p86 = scmp.eq.s32.totalorder %s17, 1
    %p87 = por %p85, %p86
    %p88 = scmp.ne.s32.totalorder %s77, %s78
    %p89 = scmp.eq.s32.totalorder %s17, 0
    %p90 = por %p88, %p89
    %p91 = scmp.ne.s32.totalorder %s77, %s78
    %p92 = scmp.eq.s32.totalorder %s18, 1
    %p93 = por %p91, %p92
    %p95 = scmp.ne.s32.totalorder %s78, %s94
    %p96 = scmp.eq.s32.totalorder %s18, 0
    %p97 = por %p95, %p96
    %s98 = ssub.s32 %s12, %s19
    %p99 = scmp.eq.s32.totalorder %s98, 0
    %s101 = sadd.s32 %s100, 1
    %s102 = scalar_select %p99, %s100, %s101
    %p105 = pneg %p99
    %p106 = scmp.eq.s32.totalorder %s12, 1
    %p107 = por %p105, %p106
    %p108 = scmp.ne.s32.totalorder %s100, %s103
    %p109 = scmp.eq.s32.totalorder %s12, 0
    %p110 = por %p108, %p109
    %p111 = scmp.ne.s32.totalorder %s100, %s103
    %p112 = scmp.eq.s32.totalorder %s17, 1
    %p113 = por %p111, %p112
    %p114 = scmp.ne.s32.totalorder %s103, %s104
    %p115 = scmp.eq.s32.totalorder %s17, 0
    %p116 = por %p114, %p115
    %p117 = scmp.ne.s32.totalorder %s103, %s104
    %p118 = scmp.eq.s32.totalorder %s18, 1
    %p119 = por %p117, %p118
    %p121 = scmp.ne.s32.totalorder %s104, %s120
    %p122 = scmp.eq.s32.totalorder %s18, 0
    %p123 = por %p121, %p122
    %s124 = ssub.s32 %s12, %s19
    %p125 = scmp.eq.s32.totalorder %s124, 0
    %s127 = sadd.s32 %s126, 1
    %s128 = scalar_select %p125, %s126, %s127
    %p131 = pneg %p125
    %p132 = scmp.eq.s32.totalorder %s12, 1
    %p133 = por %p131, %p132
    %p134 = scmp.ne.s32.totalorder %s126, %s129
    %p135 = scmp.eq.s32.totalorder %s12, 0
    %p136 = por %p134, %p135
    %p137 = scmp.ne.s32.totalorder %s126, %s129
    %p138 = scmp.eq.s32.totalorder %s17, 1
    %p139 = por %p137, %p138
    %p140 = scmp.ne.s32.totalorder %s129, %s130
    %p141 = scmp.eq.s32.totalorder %s17, 0
    %p142 = por %p140, %p141
    %p143 = scmp.ne.s32.totalorder %s129, %s130
    %p144 = scmp.eq.s32.totalorder %s18, 1
    %p145 = por %p143, %p144
    %p147 = scmp.ne.s32.totalorder %s130, %s146
    %p148 = scmp.eq.s32.totalorder %s18, 0
    %p149 = por %p147, %p148
    %s151 = sadd.s32 %s150, 1
    %p154 = scmp.eq.s32.totalorder %s12, 1
    %p155 = scmp.ne.s32.totalorder %s150, %s152
    %p156 = scmp.eq.s32.totalorder %s12, 0
    %p157 = por %p155, %p156
    %p158 = scmp.ne.s32.totalorder %s150, %s152
    %p159 = scmp.eq.s32.totalorder %s17, 1
    %p160 = por %p158, %p159
    %p161 = scmp.ne.s32.totalorder %s152, %s153
    %p162 = scmp.eq.s32.totalorder %s17, 0
    %p163 = por %p161, %p162
    %p164 = scmp.ne.s32.totalorder %s152, %s153
    %p165 = scmp.eq.s32.totalorder %s18, 1
    %p166 = por %p164, %p165
    %p168 = scmp.ne.s32.totalorder %s153, %s167
    %p169 = scmp.eq.s32.totalorder %s18, 0
    %p170 = por %p168, %p169
    %s171 = ssub.s32 %s12, %s19
    %p172 = scmp.eq.s32.totalorder %s171, 0
    %s174 = sadd.s32 %s173, 1
    %s175 = scalar_select %p172, %s173, %s174
    %p178 = pneg %p172
    %p179 = scmp.eq.s32.totalorder %s12, 1
    %p180 = por %p178, %p179
    %p181 = scmp.ne.s32.totalorder %s173, %s176
    %p182 = scmp.eq.s32.totalorder %s12, 0
    %p183 = por %p181, %p182
    %p184 = scmp.ne.s32.totalorder %s173, %s176
    %p185 = scmp.eq.s32.totalorder %s17, 1
    %p186 = por %p184, %p185
    %p187 = scmp.ne.s32.totalorder %s176, %s177
    %p188 = scmp.eq.s32.totalorder %s17, 0
    %p189 = por %p187, %p188
    %p190 = scmp.ne.s32.totalorder %s176, %s177
    %p191 = scmp.eq.s32.totalorder %s18, 1
    %p192 = por %p190, %p191
    %p194 = scmp.ne.s32.totalorder %s177, %s193
    %p195 = scmp.eq.s32.totalorder %s18, 0
    %p196 = por %p194, %p195
    %p197 = scmp.le.s32.totalorder 1, %s12
    %p198 = scmp.lt.s32.totalorder %s12, 3
    %p199 = pnand %p197, %p198
    %p200 = pneg %p199
    // Predicated region
    $region9: #{model_forward.6} parent=5 // pred_check
      _
    $region10: #{model_forward.6} parent=5 // pred_check_branch
      %202 = sbr.rel (%p199) target = $region12
    $region11: #{model_forward.6} parent=5 // pred_region
      %s203 = ssub.s32 %s12, 1
      // Predicated region
      $region13: #{model_forward.6} parent=11 // pred_check
        %p204 = pneg %p163
      $region14: #{model_forward.6} parent=11 // pred_check_branch
        %206 = sbr.rel (%p204) target = $region16
      $region15: #{model_forward.6} parent=11 // pred_region
        _
      $region16: #{model_forward.6} parent=11 // pred_fallthru
        _
    $region12: #{model_forward.6} parent=5 // pred_fallthru
      _
    %p207 = scmp.lt.s32.totalorder %s12, 2
    // Predicated region
    $region17: #{model_forward.6} parent=5 // pred_check
      %p208 = pneg %p207
    $region18: #{model_forward.6} parent=5 // pred_check_branch
      %210 = sbr.rel (%p208) target = $region20
    $region19: #{model_forward.6} parent=5 // pred_region
      // Predicated region
      $region21: #{model_forward.6} parent=19 // pred_check
        %p211 = pneg %p32
      $region22: #{model_forward.6} parent=19 // pred_check_branch
        %213 = sbr.rel (%p211) target = $region24
      $region23: #{model_forward.6} parent=19 // pred_region
        %p214 = scmp.lt.s32.totalorder %s12, 1
        %s215 = scalar_select %p214, %s12, 1
        %s216 = scalar_lea.vmem %s0, %s215
      $region24: #{model_forward.6} parent=19 // pred_fallthru
        _
      // Predicated region
      $region25: #{model_forward.6} parent=19 // pred_check
        %p217 = pneg %p58
      $region26: #{model_forward.6} parent=19 // pred_check_branch
        %219 = sbr.rel (%p217) target = $region28
      $region27: #{model_forward.6} parent=19 // pred_region
        %p220 = scmp.lt.s32.totalorder %s12, 1
        %s221 = scalar_select %p220, %s12, 1
        %s222 = smul.addr %s221, 2
        %s223 = scalar_lea.vmem %s1, %s222
      $region28: #{model_forward.6} parent=19 // pred_fallthru
        _
      // Predicated region
      $region29: #{model_forward.6} parent=19 // pred_check
        %p224 = pneg %p84
      $region30: #{model_forward.6} parent=19 // pred_check_branch
        %226 = sbr.rel (%p224) target = $region32
      $region31: #{model_forward.6} parent=19 // pred_region
        %p227 = scmp.lt.s32.totalorder %s12, 1
        %s228 = scalar_select %p227, %s12, 1
        %s229 = scalar_lea.vmem %s2, %s228
      $region32: #{model_forward.6} parent=19 // pred_fallthru
        _
      // Predicated region
      $region33: #{model_forward.6} parent=19 // pred_check
        %p230 = pneg %p110
      $region34: #{model_forward.6} parent=19 // pred_check_branch
        %232 = sbr.rel (%p230) target = $region36
      $region35: #{model_forward.6} parent=19 // pred_region
        %p233 = scmp.lt.s32.totalorder %s12, 1
        %s234 = scalar_select %p233, %s12, 1
        %s235 = smul.addr %s234, 2
        %s236 = scalar_lea.vmem %s3, %s235
      $region36: #{model_forward.6} parent=19 // pred_fallthru
        _
      // Predicated region
      $region37: #{model_forward.6} parent=19 // pred_check
        %p237 = pneg %p136
      $region38: #{model_forward.6} parent=19 // pred_check_branch
        %239 = sbr.rel (%p237) target = $region40
      $region39: #{model_forward.6} parent=19 // pred_region
        %p240 = scmp.lt.s32.totalorder %s12, 1
        %s241 = scalar_select %p240, %s12, 1
        %s242 = smul.addr %s241, 2
        %s243 = scalar_lea.vmem %s4, %s242
      $region40: #{model_forward.6} parent=19 // pred_fallthru
        _
    $region20: #{model_forward.6} parent=5 // pred_fallthru
      _
    %p244 = scmp.le.s32.totalorder 1, %s12
    %p245 = scmp.lt.s32.totalorder %s12, 3
    %p246 = pnand %p244, %p245
    %p247 = pneg %p246
    // Predicated region
    $region41: #{model_forward.6} parent=5 // pred_check
      _
    $region42: #{model_forward.6} parent=5 // pred_check_branch
      %249 = sbr.rel (%p246) target = $region44
    $region43: #{model_forward.6} parent=5 // pred_region
      %s250 = ssub.s32 %s12, 1
      %p251 = scmp.lt.s32.totalorder %s17, 1
      %s252 = scalar_select %p251, %s17, 1
      %s253 = scalar_lea.vmem %s0, %s252
      %p254 = pneg %p38
      %p255 = pneg %p35
      %p256 = scmp.lt.s32.totalorder %s17, 1
      %s257 = scalar_select %p256, %s17, 1
      %s258 = smul.addr %s257, 2
      %s259 = scalar_lea.vmem %s1, %s258
      %p260 = pneg %p64
      %p261 = pneg %p61
      %p262 = scmp.lt.s32.totalorder %s17, 1
      %s263 = scalar_select %p262, %s17, 1
      %s264 = scalar_lea.vmem %s2, %s263
      %p265 = pneg %p90
      %p266 = pneg %p87
      %p267 = scmp.lt.s32.totalorder %s17, 1
      %s268 = scalar_select %p267, %s17, 1
      %s269 = smul.addr %s268, 2
      %s270 = scalar_lea.vmem %s3, %s269
      %p271 = pneg %p116
      %p272 = pneg %p113
      %p273 = scmp.lt.s32.totalorder %s17, 1
      %s274 = scalar_select %p273, %s17, 1
      %s275 = smul.addr %s274, 2
      %s276 = scalar_lea.vmem %s4, %s275
      %p277 = pneg %p142
      %p278 = pneg %p139
      %p279 = pneg %p163
      %p280 = pneg %p160
      %p281 = pneg %p189
      %p282 = pneg %p186
      %p283 = scmp.lt.s32.totalorder %s17, 1
      %s284 = scalar_select %p283, %s17, 1
      %s285 = scalar_lea.vmem %s6, %s284
      %p286 = scmp.lt.s32.totalorder %s17, 1
      %s287 = scalar_select %p286, %s17, 1
      %s288 = scalar_lea.vmem %s0, %s287
      %p289 = scmp.lt.s32.totalorder %s17, 1
      %s290 = scalar_select %p289, %s17, 1
      %s291 = smul.addr %s290, 2
      %s292 = scalar_lea.vmem %s1, %s291
      %p293 = scmp.lt.s32.totalorder %s17, 1
      %s294 = scalar_select %p293, %s17, 1
      %s295 = scalar_lea.vmem %s2, %s294
      %p296 = scmp.lt.s32.totalorder %s17, 1
      %s297 = scalar_select %p296, %s17, 1
      %s298 = smul.addr %s297, 2
      %s299 = scalar_lea.vmem %s3, %s298
      %p300 = scmp.lt.s32.totalorder %s17, 1
      %s301 = scalar_select %p300, %s17, 1
      %s302 = smul.addr %s301, 2
      %s303 = scalar_lea.vmem %s4, %s302
      %p304 = scmp.lt.s32.totalorder %s17, 1
      %s305 = scalar_select %p304, %s17, 1
      %s306 = scalar_lea.vmem %s6, %s305
      %v308 = vld [vmem:[%s292] sm:$0x3]
      %v309 = vld [vmem:[%s295] sm:$0x1]
      %311 = vset.pattern.permute.xlu0 0
      %312 = vperm.xlu0 %311, %v308
      %v313 = vpop.permute.xlu0 %312
      %v316 = vlaneseq
      %v317 = vshrl.u32 %v316, 7
      %v318 = vsub.s32 0, %v317
      %v319 = vrot.slane %v309, %v318
      %v321 = vadd.f32 %v313, %v319
      %vm322 = vcmp.gt.f32.partialorder %v321, 0.0
      %v323 = vmul.f32 %v321, 0.2
      %v324 = vsel %vm322, %v321, %v323
      %v325 = vld [vmem:[%s288] sm:$0x1]
      %v326 = vunpack.c.l.bf16 %v325
      %v327 = vadd.f32 %v324, %v326
      %vm328 = vcmask 9216
      %v329 = vsel %vm328, %v327, -inf
      %330 = vmax.xlane.f32.xlu0 %v329
      %v331 = vpop.xlane.xlu0 %330
      %v332 = vsub.f32 %v327, %v331
      %v333 = vmul.f32 %v332, 1.442695
      %v334 = vpow.pop %v333
      %v335 = vsel %vm328, %v334, 0.0
      %336 = vadd.xlane.f32.xlu0 %v335
      %v337 = vpop.xlane.xlu0 %336
      %v338 = vrcp.pop %v337
      %v339 = vmul.f32 %v334, %v338
      %v340 = vpack.c.bf16 %v339, %v339
      %v341 = vsel %vm328, %v339, 0.0
      %342 = vadd.xlane.f32.xlu0 %v341
      %v343 = vpop.xlane.xlu0 %342
      %vm344 = vcmp.gt.f32.partialorder %v343, 0.0
      %v345 = vmax.f32 %v343, 1e-12
      %v346 = vrsqrt.pop %v345
      %v347 = vsel %vm344, %v346, 0.0
      %v348 = vld [vmem:[%s303] sm:$0x3]
      %v349 = vmul.f32 %v348, %v347
      %v350 = vpack.c.bf16 %v349, %v349
      %vm351 = vcmask 15360
      %v353 = vsel %vm351, %v340, 0
      %vm355 = vcmask 1040384
      %v357 = vsel %vm355, %v350, 0
      %359 = vmatprep.subr.bf16.mxu0 0
      %360 = vmatpush1.bf16.msra.mxu0 %v357
      %361 = vmatprep.subr.bf16.mxu0 0
      %362 = vmatpush1.bf16.msra.mxu0 0
      %363 = vmatprep.subr.bf16.mxu0 0
      %364 = vmatpush1.bf16.msra.mxu0 0
      %365 = vmatprep.subr.bf16.mxu0 0
      %366 = vmatpush1.bf16.msra.mxu0 0
      %367 = vmatprep.subr.bf16.mxu0 0
      %368 = vmatpush1.bf16.msra.mxu0 0
      %369 = vmatprep.subr.bf16.mxu0 0
      %370 = vmatpush1.bf16.msra.mxu0 0
      %371 = vmatprep.subr.bf16.mxu0 0
      %372 = vmatpush1.bf16.msra.mxu0 0
      %373 = vmatprep.subr.bf16.mxu0 0
      %374 = vmatpush1.bf16.msra.mxu0 0
      %375 = vmatprep.subr.bf16.mxu0 0
      %376 = vmatpush1.bf16.msra.mxu0 0
      %377 = vmatprep.subr.bf16.mxu0 0
      %378 = vmatpush1.bf16.msra.mxu0 0
      %379 = vmatprep.subr.bf16.mxu0 0
      %380 = vmatpush1.bf16.msra.mxu0 0
      %381 = vmatprep.subr.bf16.mxu0 0
      %382 = vmatpush1.bf16.msra.mxu0 0
      %383 = vmatprep.subr.bf16.mxu0 0
      %384 = vmatpush1.bf16.msra.mxu0 0
      %385 = vmatprep.subr.bf16.mxu0 0
      %386 = vmatpush1.bf16.msra.mxu0 0
      %387 = vmatprep.subr.bf16.mxu0 0
      %388 = vmatpush1.bf16.msra.mxu0 0
      %389 = vmatprep.subr.bf16.mxu0 0
      %390 = vmatpush1.bf16.msra.mxu0 0
      %391 = vmatprep.mubr.bf16.mxu0 0
      %392 = vmatmul.mubr.bf16.gmra.mrb[0].mxu0 %v353
      %v393 = vpop.f32.mrb[0].mxu0
      %v394 = vadd.f32 0.0, %v393
      %v395 = vpop.f32.mrb[0].mxu0
      %v396 = vpop.f32.mrb[0].mxu0
      %v397 = vpop.f32.mrb[0].mxu0
      %398 = vdwg.mxu0
      %v399 = vmul.f32 %v347, %v394
      %v400 = vld [vmem:[%s5] sm:$0x1]
      %v402 = vlaneseq
      %v403 = vshrl.u32 %v402, 7
      %v404 = vsub.s32 0, %v403
      %v405 = vrot.slane %v400, %v404
      %v407 = vadd.f32 %v399, %v405
      %v408 = vmax.f32 %v407, 0.0
      %v409 = vld [vmem:[%s299] sm:$0x3]
      %vm410 = vcmask 254976
      %v411 = vsel %vm410, %v409, -inf
      %v412 = vrot.slane %v411, 4
      %v413 = vmax.f32 %v411, %v412
      %v414 = vrot.slane %v413, 2
      %v415 = vmax.f32 %v413, %v414
      %v416 = vrot.slane %v415, 1
      %v417 = vmax.f32 %v415, %v416
      %v418 = vmax.f32 %v417, 0.0
      %v419 = vsel %vm410, %v408, -inf
      %v420 = vrot.slane %v419, 4
      %v421 = vmax.f32 %v419, %v420
      %v422 = vrot.slane %v421, 2
      %v423 = vmax.f32 %v421, %v422
      %v424 = vrot.slane %v423, 1
      %v425 = vmax.f32 %v423, %v424
      %v426 = vmax.f32 %v425, 0.0
      %v427 = vadd.f32 %v418, %v426
      %v428 = vsel %vm410, %v409, 0.0
      %v429 = vrot.slane %v428, 4
      %v430 = vadd.f32 %v428, %v429
      %v431 = vrot.slane %v430, 2
      %v432 = vadd.f32 %v430, %v431
      %v433 = vrot.slane %v432, 1
      %v434 = vadd.f32 %v432, %v433
      %v435 = vmul.f32 %v434, 0.5
      %v436 = vmax.f32 %v435, 0.0
      %v437 = vsel %vm410, %v408, 0.0
      %v438 = vrot.slane %v437, 4
      %v439 = vadd.f32 %v437, %v438
      %v440 = vrot.slane %v439, 2
      %v441 = vadd.f32 %v439, %v440
      %v442 = vrot.slane %v441, 1
      %v443 = vadd.f32 %v441, %v442
      %v444 = vmul.f32 %v443, 0.5
      %v445 = vmax.f32 %v444, 0.0
      %v446 = vadd.f32 %v436, %v445
      %vm447 = vcmask 253952
      %448 = vst.msk [vmem:[%s306] sm:$0x1] %vm447, %v427
      %450 = vrot.lane.b32.xlu0 %v446, 32
      %v451 = vpop.permute.xlu0 %450
      %vm453 = vcmask 516352
      %454 = vst.msk [vmem:[%s306] sm:$0x1] %vm453, %v451
      %p455 = scmp.lt.s32.totalorder %s17, 1
      %s456 = scalar_select %p455, %s17, 1
      %s457 = scalar_lea.vmem %s6, %s456
      // Predicated region
      $region45: #{model_forward.6} parent=43 // pred_check
        %p458 = pneg %p186
      $region46: #{model_forward.6} parent=43 // pred_check_branch
        %460 = sbr.rel (%p458) target = $region48
      $region47: #{model_forward.6} parent=43 // pred_region
        _
      $region48: #{model_forward.6} parent=43 // pred_fallthru
        _
    $region44: #{model_forward.6} parent=5 // pred_fallthru
      _
    %p461 = scmp.le.s32.totalorder 2, %s12
    // Predicated region
    $region49: #{model_forward.6} parent=5 // pred_check
      %p462 = pneg %p461
    $region50: #{model_forward.6} parent=5 // pred_check_branch
      %464 = sbr.rel (%p462) target = $region52
    $region51: #{model_forward.6} parent=5 // pred_region
      %s465 = ssub.s32 %s12, 2
      // Predicated region
      $region53: #{model_forward.6} parent=51 // pred_check
        %p466 = pneg %p192
      $region54: #{model_forward.6} parent=51 // pred_check_branch
        %468 = sbr.rel (%p466) target = $region56
      $region55: #{model_forward.6} parent=51 // pred_region
        %p469 = scmp.lt.s32.totalorder %s18, 1
        %s470 = scalar_select %p469, %s18, 1
        %s471 = scalar_lea.vmem %s6, %s470
      $region56: #{model_forward.6} parent=51 // pred_fallthru
        _
    $region52: #{model_forward.6} parent=5 // pred_fallthru
      _
  $region6: #{model_forward.6} parent=0 // loop_footer
    %s16 = sadd.s32 1, %s12
  $region7: #{model_forward.6} parent=0 // loop_footer_branch
    %11 = sbr.rel target = $region3
  $region8: #{model_forward.6} parent=0 // loop_exit
    _

</llo_original>
